<compile_context>
chip_gen: v7x
topology: tpu7x:2x2x1
jax: 0.10.0
libtpu: 0.0.40
codegen_flags: <defaults>
</compile_context>

<pallas_src>
import functools

import jax
import jax.numpy as jnp
from jax import lax
from jax.experimental import pallas as pl
from jax.experimental.pallas import tpu as pltpu

IN, H1, H2, OUT = 6, 12, 12, 3

# f32-accurate MXU passes so results stay within ~1e-5 of the f32 reference.
_MXU_PREC = lax.Precision.HIGHEST


def _round_up(v, m):
    return -(-v // m) * m


def mlp_kernel(x_ref, w1_ref, b1_ref, w2_ref, b2_ref, w3_ref, b3_ref, o_ref):
    """One batch tile, lane-dense: x_ref (IN, TILE_B) -> o_ref (OUT, TILE_B)."""
    tile_b = x_ref.shape[-1]
    chunk = next(c for c in (512, 256, 128) if tile_b % c == 0)

    # Params are VMEM-resident across the whole grid (constant index_map).
    w1 = w1_ref[...]                                   # (H1, IN)
    w2 = w2_ref[...]                                   # (H2, H1)
    w3 = w3_ref[...]                                   # (OUT, H2)
    # Hoist the lane-broadcast of the biases out of the chunk loop
    # (JAX does not CSE broadcast_in_dim).
    b1 = jnp.broadcast_to(b1_ref[...], (H1, chunk))
    b2 = jnp.broadcast_to(b2_ref[...], (H2, chunk))
    b3 = jnp.broadcast_to(b3_ref[...], (OUT, chunk))

    def dense(w, b, act):
        # MXU: (out_f, in_f) @ (in_f, chunk) -> (out_f, chunk); bias on the VPU.
        return jnp.dot(w, act, preferred_element_type=jnp.float32,
                       precision=_MXU_PREC) + b

    # Run all three layers per `chunk`-lane piece so live vregs stay ~20
    # instead of holding full-tile-width h1/h2 (which would spill).
    for c in range(tile_b // chunk):
        lo = c * chunk                                  # static, 128-aligned
        x = x_ref[:, lo:lo + chunk]                     # (IN, chunk)
        h = jnp.maximum(dense(w1, b1, x), 0.0)          # (H1, chunk) ReLU
        h = jnp.maximum(dense(w2, b2, h), 0.0)          # (H2, chunk) ReLU
        y = dense(w3, b3, h)                            # (OUT, chunk)
        o_ref[:, lo:lo + chunk] = y.astype(o_ref.dtype)


@functools.partial(jax.jit, static_argnames=("max_tile_b",))
def neural_net_forward(x, params, *, max_tile_b=32768):
    """out = fc3(relu(fc2(relu(fc1(x)))));  x: (B, IN) f32 -> (B, OUT) f32."""
    (w1, b1, w2, b2, w3, b3) = params
    B = x.shape[0]

    # Batch lives on the 128-lane axis.  Pick the largest tile <= max_tile_b,
    # keep >= 2 grid steps for large batches (v7x has 2 TensorCores), then
    # equalize tiles so the ragged-tail padding is minimal.
    t = max(128, min(max_tile_b, _round_up(B, 128)))
    grid_b = pl.cdiv(B, t)
    if grid_b == 1 and B > 128:
        grid_b = 2
    tile_b = _round_up(pl.cdiv(B, grid_b), 128)
    b_pad = grid_b * tile_b

    # Lane-dense input: one fused XLA pass (transpose + ragged-tail pad only).
    xt = x.T
    if b_pad != B:
        xt = jnp.pad(xt, ((0, 0), (0, b_pad - B)))

    const = lambda i: (0, 0)   # params: same block every step -> stay resident

    flops = 2 * b_pad * (IN * H1 + H1 * H2 + H2 * OUT)
    bytes_accessed = 4 * (b_pad * (IN + OUT)
                          + H1 * (IN + 1) + H2 * (H1 + 1) + OUT * (H2 + 1))

    out_t = pl.pallas_call(
        mlp_kernel,
        out_shape=jax.ShapeDtypeStruct((OUT, b_pad), jnp.float32),
        grid_spec=pltpu.PrefetchScalarGridSpec(
            num_scalar_prefetch=0,
            grid=(grid_b,),
            in_specs=[
                pl.BlockSpec((IN, tile_b), lambda i: (0, i)),   # x tile (streamed)
                pl.BlockSpec((H1, IN), const),                   # fc1.weight
                pl.BlockSpec((H1, 1), const),                    # fc1.bias
                pl.BlockSpec((H2, H1), const),                   # fc2.weight
                pl.BlockSpec((H2, 1), const),                    # fc2.bias
                pl.BlockSpec((OUT, H2), const),                  # fc3.weight
                pl.BlockSpec((OUT, 1), const),                   # fc3.bias
            ],
            out_specs=pl.BlockSpec((OUT, tile_b), lambda i: (0, i)),
        ),
        compiler_params=pltpu.CompilerParams(
            # Batch tiles are independent -> shard across v7x's 2 TensorCores.
            dimension_semantics=("parallel",),
            # Streamed blocks are ~1 MiB each, double-buffered; 32 MiB is safe
            # on v5e/v6e (128 MiB physical) and on v7x (64 MiB physical).
            vmem_limit_bytes=32 * 1024 * 1024,
        ),
        cost_estimate=pl.CostEstimate(
            flops=flops, transcendentals=0, bytes_accessed=bytes_accessed),
    )(xt, w1, b1[:, None], w2, b2[:, None], w3, b3[:, None])

    return out_t[:, :B].T


def init_params(key):
    """Deterministic init mimicking nn.Linear defaults (uniform +/- 1/sqrt(fan_in)).

    Weights stored in PyTorch layout: (out_features, in_features); bias (out_features,).
    """
    def linear(k, fan_in, fan_out):
        kw, kb = jax.random.split(k)
        bound = fan_in ** -0.5
        w = jax.random.uniform(kw, (fan_out, fan_in), jnp.float32, -bound, bound)
        b = jax.random.uniform(kb, (fan_out,), jnp.float32, -bound, bound)
        return w, b

    k1, k2, k3 = jax.random.split(key, 3)
    w1, b1 = linear(k1, IN, H1)
    w2, b2 = linear(k2, H1, H2)
    w3, b3 = linear(k3, H2, OUT)
    return (w1, b1, w2, b2, w3, b3)


def reference_forward(x, params):
    (w1, b1, w2, b2, w3, b3) = params
    h1 = jnp.maximum(x @ w1.T + b1, 0.0)
    h2 = jnp.maximum(h1 @ w2.T + b2, 0.0)
    return h2 @ w3.T + b3


if __name__ == "__main__":
    key = jax.random.PRNGKey(0)
    kx, kp = jax.random.split(key)
    B = 8
    x = jax.random.normal(kx, (B, IN), dtype=jnp.float32)
    params = init_params(kp)

    out = neural_net_forward(x, params)
    out = jax.block_until_ready(out)

    ref = reference_forward(x, params)
    assert out.shape == (B, OUT)
    # MXU f32 (Precision.HIGHEST) + different accumulation order than the jnp
    # reference -> deliberately use a slightly looser (still tight) tolerance.
    assert jnp.allclose(out, ref, atol=1e-4, rtol=1e-4), float(
        jnp.max(jnp.abs(out - ref)))
    print("KERNEL_OK")
</pallas_src>

<mosaic_0001>
module attributes {stable_mosaic.version = 11 : i64} {
  func.func @mlp_kernel(%arg0: i32, %arg1: memref<6x128xf32, #tpu.memory_space<vmem>>, %arg2: memref<12x6xf32, #tpu.memory_space<vmem>>, %arg3: memref<12x1xf32, #tpu.memory_space<vmem>>, %arg4: memref<12x12xf32, #tpu.memory_space<vmem>>, %arg5: memref<12x1xf32, #tpu.memory_space<vmem>>, %arg6: memref<3x12xf32, #tpu.memory_space<vmem>>, %arg7: memref<3x1xf32, #tpu.memory_space<vmem>>, %arg8: memref<3x128xf32, #tpu.memory_space<vmem>>) attributes {dimension_semantics = [#tpu.dimension_semantics<parallel>], iteration_bounds = array<i64: 1>, scalar_prefetch = 0 : i64, scratch_operands = 0 : i64, tpu.core_type = #tpu.core_type<tc>, window_params = [{transform_indices = @transform_0, window_bounds = array<i64: 6, 128>}, {pipeline_mode = #tpu.pipeline_mode<synchronous>, transform_indices = @transform_1, window_bounds = array<i64: 12, 6>}, {pipeline_mode = #tpu.pipeline_mode<synchronous>, transform_indices = @transform_2, window_bounds = array<i64: 12, 1>}, {pipeline_mode = #tpu.pipeline_mode<synchronous>, transform_indices = @transform_3, window_bounds = array<i64: 12, 12>}, {pipeline_mode = #tpu.pipeline_mode<synchronous>, transform_indices = @transform_4, window_bounds = array<i64: 12, 1>}, {pipeline_mode = #tpu.pipeline_mode<synchronous>, transform_indices = @transform_5, window_bounds = array<i64: 3, 12>}, {pipeline_mode = #tpu.pipeline_mode<synchronous>, transform_indices = @transform_6, window_bounds = array<i64: 3, 1>}, {transform_indices = @transform_7, window_bounds = array<i64: 3, 128>}]} {
    %c0 = arith.constant 0 : index
    %c0_0 = arith.constant 0 : index
    %0 = vector.load %arg2[%c0, %c0_0] : memref<12x6xf32, #tpu.memory_space<vmem>>, vector<12x6xf32>
    %c0_1 = arith.constant 0 : index
    %c0_2 = arith.constant 0 : index
    %1 = vector.load %arg4[%c0_1, %c0_2] : memref<12x12xf32, #tpu.memory_space<vmem>>, vector<12x12xf32>
    %c0_3 = arith.constant 0 : index
    %c0_4 = arith.constant 0 : index
    %2 = vector.load %arg6[%c0_3, %c0_4] : memref<3x12xf32, #tpu.memory_space<vmem>>, vector<3x12xf32>
    %c0_5 = arith.constant 0 : index
    %c0_6 = arith.constant 0 : index
    %3 = vector.load %arg3[%c0_5, %c0_6] : memref<12x1xf32, #tpu.memory_space<vmem>>, vector<12x1xf32>
    %4 = vector.shape_cast %3 : vector<12x1xf32> to vector<12x1xf32>
    %5 = vector.broadcast %4 : vector<12x1xf32> to vector<12x128xf32>
    %c0_7 = arith.constant 0 : index
    %c0_8 = arith.constant 0 : index
    %6 = vector.load %arg5[%c0_7, %c0_8] : memref<12x1xf32, #tpu.memory_space<vmem>>, vector<12x1xf32>
    %7 = vector.shape_cast %6 : vector<12x1xf32> to vector<12x1xf32>
    %8 = vector.broadcast %7 : vector<12x1xf32> to vector<12x128xf32>
    %c0_9 = arith.constant 0 : index
    %c0_10 = arith.constant 0 : index
    %9 = vector.load %arg7[%c0_9, %c0_10] : memref<3x1xf32, #tpu.memory_space<vmem>>, vector<3x1xf32>
    %10 = vector.shape_cast %9 : vector<3x1xf32> to vector<3x1xf32>
    %11 = vector.broadcast %10 : vector<3x1xf32> to vector<3x128xf32>
    %c0_11 = arith.constant 0 : index
    %c0_12 = arith.constant 0 : index
    %12 = vector.load %arg1[%c0_11, %c0_12] : memref<6x128xf32, #tpu.memory_space<vmem>>, vector<6x128xf32>
    %cst = arith.constant dense<0.000000e+00> : vector<12x128xf32>
    %13 = tpu.matmul %0, %12, %cst {dimension_numbers = #tpu.dot_dimension_numbers<[1], [0], [0], [1], [0, 0, 1, 1], [], []>, precision = #tpu.contract_precision<fp32>} : vector<12x6xf32>, vector<6x128xf32>, vector<12x128xf32> -> vector<12x128xf32>
    %14 = arith.addf %13, %5 : vector<12x128xf32>
    %cst_13 = arith.constant 0.000000e+00 : f32
    %15 = vector.broadcast %cst_13 : f32 to vector<12x128xf32>
    %16 = arith.maximumf %14, %15 : vector<12x128xf32>
    %cst_14 = arith.constant dense<0.000000e+00> : vector<12x128xf32>
    %17 = tpu.matmul %1, %16, %cst_14 {dimension_numbers = #tpu.dot_dimension_numbers<[1], [0], [0], [1], [0, 0, 1, 1], [], []>, precision = #tpu.contract_precision<fp32>} : vector<12x12xf32>, vector<12x128xf32>, vector<12x128xf32> -> vector<12x128xf32>
    %18 = arith.addf %17, %8 : vector<12x128xf32>
    %cst_15 = arith.constant 0.000000e+00 : f32
    %19 = vector.broadcast %cst_15 : f32 to vector<12x128xf32>
    %20 = arith.maximumf %18, %19 : vector<12x128xf32>
    %cst_16 = arith.constant dense<0.000000e+00> : vector<3x128xf32>
    %21 = tpu.matmul %2, %20, %cst_16 {dimension_numbers = #tpu.dot_dimension_numbers<[1], [0], [0], [1], [0, 0, 1, 1], [], []>, precision = #tpu.contract_precision<fp32>} : vector<3x12xf32>, vector<12x128xf32>, vector<3x128xf32> -> vector<3x128xf32>
    %22 = arith.addf %21, %11 : vector<3x128xf32>
    %c0_17 = arith.constant 0 : index
    %c0_18 = arith.constant 0 : index
    %23 = vector.load %arg8[%c0_17, %c0_18] : memref<3x128xf32, #tpu.memory_space<vmem>>, vector<3x128xf32>
    tpu.vector_store %arg8[%c0_17, %c0_18], %22 {strides = array<i32>} : memref<3x128xf32, #tpu.memory_space<vmem>>, vector<3x128xf32>,
    return
  }
  func.func @transform_0(%arg0: i32) -> (i32, i32) {
    %c0_i32 = arith.constant 0 : i32
    %c0_i32_0 = arith.constant 0 : i32
    return %c0_i32, %arg0 : i32, i32
  }
  func.func @transform_1(%arg0: i32) -> (i32, i32) {
    %c0_i32 = arith.constant 0 : i32
    %c0_i32_0 = arith.constant 0 : i32
    %c0_i32_1 = arith.constant 0 : i32
    return %c0_i32, %c0_i32_0 : i32, i32
  }
  func.func @transform_2(%arg0: i32) -> (i32, i32) {
    %c0_i32 = arith.constant 0 : i32
    %c0_i32_0 = arith.constant 0 : i32
    %c0_i32_1 = arith.constant 0 : i32
    return %c0_i32, %c0_i32_0 : i32, i32
  }
  func.func @transform_3(%arg0: i32) -> (i32, i32) {
    %c0_i32 = arith.constant 0 : i32
    %c0_i32_0 = arith.constant 0 : i32
    %c0_i32_1 = arith.constant 0 : i32
    return %c0_i32, %c0_i32_0 : i32, i32
  }
  func.func @transform_4(%arg0: i32) -> (i32, i32) {
    %c0_i32 = arith.constant 0 : i32
    %c0_i32_0 = arith.constant 0 : i32
    %c0_i32_1 = arith.constant 0 : i32
    return %c0_i32, %c0_i32_0 : i32, i32
  }
  func.func @transform_5(%arg0: i32) -> (i32, i32) {
    %c0_i32 = arith.constant 0 : i32
    %c0_i32_0 = arith.constant 0 : i32
    %c0_i32_1 = arith.constant 0 : i32
    return %c0_i32, %c0_i32_0 : i32, i32
  }
  func.func @transform_6(%arg0: i32) -> (i32, i32) {
    %c0_i32 = arith.constant 0 : i32
    %c0_i32_0 = arith.constant 0 : i32
    %c0_i32_1 = arith.constant 0 : i32
    return %c0_i32, %c0_i32_0 : i32, i32
  }
  func.func @transform_7(%arg0: i32) -> (i32, i32) {
    %c0_i32 = arith.constant 0 : i32
    %c0_i32_0 = arith.constant 0 : i32
    return %c0_i32, %arg0 : i32, i32
  }
}

</mosaic_0001>

<llo_original>
// kernel: neural_net_forward.1
$region0: #{neural_net_forward.1}
  #allocation0 [shape = 'u32[]', space=smem, size = 0x4, offset = 0x4, fixed_abs, tag = 'smem constant byte address 0x4 - core index']
  #allocation1 [shape = 'u32[144,128]{1,0:T(1,128)}', space=vmem, size = 0x12000, scoped, tag = 'internal scratch']
  %s0 = inlined_call_operand.vmem [shape: f32[6,128], index: 0, kind: input, shape index: {}]
  %s1 = inlined_call_operand.vmem [shape: f32[12,6], index: 1, kind: input, shape index: {}]
  %s2 = inlined_call_operand.vmem [shape: f32[12,1], index: 2, kind: input, shape index: {}]
  %s3 = inlined_call_operand.vmem [shape: f32[12,12], index: 3, kind: input, shape index: {}]
  %s4 = inlined_call_operand.vmem [shape: f32[12,1], index: 4, kind: input, shape index: {}]
  %s5 = inlined_call_operand.vmem [shape: f32[3,12], index: 5, kind: input, shape index: {}]
  %s6 = inlined_call_operand.vmem [shape: f32[3,1], index: 6, kind: input, shape index: {}]
  %s7 = inlined_call_operand.vmem [shape: f32[3,128], index: 7, kind: output, shape index: {}]
  %s8 = sld [smem:[#allocation0]]
  $region38: #{neural_net_forward.1} parent=0
    _
  %s10 = ssub.s32 1, %s8
  %s11 = scalar_select 0, %s10, %s8
  // Predicated region
  $region2: #{neural_net_forward.1} parent=0 // pred_check
    _
  $region3: #{neural_net_forward.1} parent=0 // pred_check_branch
    %13 = sbr.rel (0) target = $region5
  $region4: #{neural_net_forward.1} parent=0 // pred_region
    _
  $region5: #{neural_net_forward.1} parent=0 // pred_fallthru
    _
  // Predicated region
  $region6: #{neural_net_forward.1} parent=0 // pred_check
    _
  $region7: #{neural_net_forward.1} parent=0 // pred_check_branch
    %15 = sbr.rel (0) target = $region9
  $region8: #{neural_net_forward.1} parent=0 // pred_region
    _
  $region9: #{neural_net_forward.1} parent=0 // pred_fallthru
    _
  // Predicated region
  $region10: #{neural_net_forward.1} parent=0 // pred_check
    _
  $region11: #{neural_net_forward.1} parent=0 // pred_check_branch
    %17 = sbr.rel (0) target = $region13
  $region12: #{neural_net_forward.1} parent=0 // pred_region
    _
  $region13: #{neural_net_forward.1} parent=0 // pred_fallthru
    _
  // Predicated region
  $region14: #{neural_net_forward.1} parent=0 // pred_check
    _
  $region15: #{neural_net_forward.1} parent=0 // pred_check_branch
    %19 = sbr.rel (0) target = $region17
  $region16: #{neural_net_forward.1} parent=0 // pred_region
    _
  $region17: #{neural_net_forward.1} parent=0 // pred_fallthru
    _
  // Predicated region
  $region18: #{neural_net_forward.1} parent=0 // pred_check
    _
  $region19: #{neural_net_forward.1} parent=0 // pred_check_branch
    %21 = sbr.rel (0) target = $region21
  $region20: #{neural_net_forward.1} parent=0 // pred_region
    _
  $region21: #{neural_net_forward.1} parent=0 // pred_fallthru
    _
  // Predicated region
  $region22: #{neural_net_forward.1} parent=0 // pred_check
    _
  $region23: #{neural_net_forward.1} parent=0 // pred_check_branch
    %23 = sbr.rel (0) target = $region25
  $region24: #{neural_net_forward.1} parent=0 // pred_region
    _
  $region25: #{neural_net_forward.1} parent=0 // pred_fallthru
    _
  // Predicated region
  $region26: #{neural_net_forward.1} parent=0 // pred_check
    _
  $region27: #{neural_net_forward.1} parent=0 // pred_check_branch
    %25 = sbr.rel (0) target = $region29
  $region28: #{neural_net_forward.1} parent=0 // pred_region
    _
  $region29: #{neural_net_forward.1} parent=0 // pred_fallthru
    _
  %v26 = vld [vmem:[%s1] sm:$0xff]
  %v27 = vld [vmem:[%s1 + $0x8] sm:$0xf]
  %v28 = vld [vmem:[%s3] sm:$0xff]
  %v29 = vld [vmem:[%s3 + $0x8] sm:$0xf]
  %v30 = vld [vmem:[%s5] sm:$0x7]
  %v31 = vld [vmem:[%s2] sm:$0xff]
  %v32 = vld [vmem:[%s2 + $0x8] sm:$0xf]
  %34 = vset.pattern.permute.xlu0 0
  %35 = vperm.xlu0 %34, %v31
  %v36 = vpop.permute.xlu0 %35
  %39 = vset.pattern.permute.xlu0 0
  %40 = vperm.xlu0 %39, %v32
  %v41 = vpop.permute.xlu0 %40
  %v43 = vld [vmem:[%s4] sm:$0xff]
  %v44 = vld [vmem:[%s4 + $0x8] sm:$0xf]
  %46 = vset.pattern.permute.xlu0 0
  %47 = vperm.xlu0 %46, %v43
  %v48 = vpop.permute.xlu0 %47
  %51 = vset.pattern.permute.xlu0 0
  %52 = vperm.xlu0 %51, %v44
  %v53 = vpop.permute.xlu0 %52
  %v55 = vld [vmem:[%s6] sm:$0x7]
  %57 = vset.pattern.permute.xlu0 0
  %58 = vperm.xlu0 %57, %v55
  %v59 = vpop.permute.xlu0 %58
  %v61 = vld [vmem:[%s0] sm:$0x3f]
  %vm62 = vcmask 48128
  %v64 = vsel %vm62, %v26, 0
  %v67 = vsel %vm62, %v27, 0
  %vm69 = vcmask 1045504
  %v71 = vsel %vm69, %v61, 0
  %73 = vmatprep.subr.mxu0 0.0
  %v74 = vand.u32 %v71, 4294901760
  %75 = vmatpush1.msra.mxu0 %v74
  %76 = vmatprep.subr.mxu0 0.0
  %77 = vmatpush1.msra.mxu0 0.0
  %78 = vmatprep.subr.mxu0 0.0
  %79 = vmatpush1.msra.mxu0 0.0
  %80 = vmatprep.subr.mxu0 0.0
  %81 = vmatpush1.msra.mxu0 0.0
  %82 = vmatprep.subr.mxu0 0.0
  %83 = vmatpush1.msra.mxu0 0.0
  %84 = vmatprep.subr.mxu0 0.0
  %85 = vmatpush1.msra.mxu0 0.0
  %86 = vmatprep.subr.mxu0 0.0
  %87 = vmatpush1.msra.mxu0 0.0
  %88 = vmatprep.subr.mxu0 0.0
  %89 = vmatpush1.msra.mxu0 0.0
  %90 = vmatprep.subr.mxu0 0.0
  %91 = vmatpush1.msra.mxu0 0.0
  %92 = vmatprep.subr.mxu0 0.0
  %93 = vmatpush1.msra.mxu0 0.0
  %94 = vmatprep.subr.mxu0 0.0
  %95 = vmatpush1.msra.mxu0 0.0
  %96 = vmatprep.subr.mxu0 0.0
  %97 = vmatpush1.msra.mxu0 0.0
  %98 = vmatprep.subr.mxu0 0.0
  %99 = vmatpush1.msra.mxu0 0.0
  %100 = vmatprep.subr.mxu0 0.0
  %101 = vmatpush1.msra.mxu0 0.0
  %102 = vmatprep.subr.mxu0 0.0
  %103 = vmatpush1.msra.mxu0 0.0
  %104 = vmatprep.subr.mxu0 0.0
  %105 = vmatpush1.msra.mxu0 0.0
  %106 = vmatprep.subr.mxu0 0.0
  %107 = vmatpush1.msra.mxu0 0.0
  %108 = vmatprep.subr.mxu0 0.0
  %109 = vmatpush1.msra.mxu0 0.0
  %110 = vmatprep.subr.mxu0 0.0
  %111 = vmatpush1.msra.mxu0 0.0
  %112 = vmatprep.subr.mxu0 0.0
  %113 = vmatpush1.msra.mxu0 0.0
  %114 = vmatprep.subr.mxu0 0.0
  %115 = vmatpush1.msra.mxu0 0.0
  %116 = vmatprep.subr.mxu0 0.0
  %117 = vmatpush1.msra.mxu0 0.0
  %118 = vmatprep.subr.mxu0 0.0
  %119 = vmatpush1.msra.mxu0 0.0
  %120 = vmatprep.subr.mxu0 0.0
  %121 = vmatpush1.msra.mxu0 0.0
  %122 = vmatprep.subr.mxu0 0.0
  %123 = vmatpush1.msra.mxu0 0.0
  %124 = vmatprep.subr.mxu0 0.0
  %125 = vmatpush1.msra.mxu0 0.0
  %126 = vmatprep.subr.mxu0 0.0
  %127 = vmatpush1.msra.mxu0 0.0
  %128 = vmatprep.subr.mxu0 0.0
  %129 = vmatpush1.msra.mxu0 0.0
  %130 = vmatprep.subr.mxu0 0.0
  %131 = vmatpush1.msra.mxu0 0.0
  %132 = vmatprep.subr.mxu0 0.0
  %133 = vmatpush1.msra.mxu0 0.0
  %134 = vmatprep.subr.mxu0 0.0
  %135 = vmatpush1.msra.mxu0 0.0
  %136 = vmatprep.subr.mxu0 0.0
  %137 = vmatpush1.msra.mxu0 0.0
  %138 = vmatprep.mubr.f32.mxu0 0.0
  %v139 = vand.u32 %v64, 4294901760
  %v140 = vsub.f32 %v64, %v139
  %v141 = vand.u32 %v140, 4294901760
  %v142 = vsub.f32 %v140, %v141
  %v143 = vand.u32 %v142, 4294901760
  %144 = vmatmul.mubr.f32.gmra.mrb[0].mxu0 %v143
  %v145 = vpop.f32.mrb[0].mxu0
  %v146 = vadd.f32 %v36, %v145
  %v147 = vpop.f32.mrb[0].mxu0
  %148 = vmatprep.mubr.f32.mxu0 0.0
  %v149 = vand.u32 %v67, 4294901760
  %v150 = vsub.f32 %v67, %v149
  %v151 = vand.u32 %v150, 4294901760
  %v152 = vsub.f32 %v150, %v151
  %v153 = vand.u32 %v152, 4294901760
  %154 = vmatmul.mubr.f32.gmra.mrb[0].mxu0 %v153
  %v155 = vpop.f32.mrb[0].mxu0
  %v156 = vadd.f32 %v41, %v155
  %v157 = vpop.f32.mrb[0].mxu0
  %158 = vdwg.mxu0
  %159 = vmatprep.subr.mxu0 0.0
  %v160 = vand.u32 %v71, 4294901760
  %v161 = vsub.f32 %v71, %v160
  %v162 = vand.u32 %v161, 4294901760
  %v163 = vsub.f32 %v161, %v162
  %v164 = vand.u32 %v163, 4294901760
  %165 = vmatpush1.msra.mxu0 %v164
  %166 = vmatprep.subr.mxu0 0.0
  %167 = vmatpush1.msra.mxu0 0.0
  %168 = vmatprep.subr.mxu0 0.0
  %169 = vmatpush1.msra.mxu0 0.0
  %170 = vmatprep.subr.mxu0 0.0
  %171 = vmatpush1.msra.mxu0 0.0
  %172 = vmatprep.subr.mxu0 0.0
  %173 = vmatpush1.msra.mxu0 0.0
  %174 = vmatprep.subr.mxu0 0.0
  %175 = vmatpush1.msra.mxu0 0.0
  %176 = vmatprep.subr.mxu0 0.0
  %177 = vmatpush1.msra.mxu0 0.0
  %178 = vmatprep.subr.mxu0 0.0
  %179 = vmatpush1.msra.mxu0 0.0
  %180 = vmatprep.subr.mxu0 0.0
  %181 = vmatpush1.msra.mxu0 0.0
  %182 = vmatprep.subr.mxu0 0.0
  %183 = vmatpush1.msra.mxu0 0.0
  %184 = vmatprep.subr.mxu0 0.0
  %185 = vmatpush1.msra.mxu0 0.0
  %186 = vmatprep.subr.mxu0 0.0
  %187 = vmatpush1.msra.mxu0 0.0
  %188 = vmatprep.subr.mxu0 0.0
  %189 = vmatpush1.msra.mxu0 0.0
  %190 = vmatprep.subr.mxu0 0.0
  %191 = vmatpush1.msra.mxu0 0.0
  %192 = vmatprep.subr.mxu0 0.0
  %193 = vmatpush1.msra.mxu0 0.0
  %194 = vmatprep.subr.mxu0 0.0
  %195 = vmatpush1.msra.mxu0 0.0
  %196 = vmatprep.subr.mxu0 0.0
  %197 = vmatpush1.msra.mxu0 0.0
  %198 = vmatprep.subr.mxu0 0.0
  %199 = vmatpush1.msra.mxu0 0.0
  %200 = vmatprep.subr.mxu0 0.0
  %201 = vmatpush1.msra.mxu0 0.0
  %202 = vmatprep.subr.mxu0 0.0
  %203 = vmatpush1.msra.mxu0 0.0
  %204 = vmatprep.subr.mxu0 0.0
  %205 = vmatpush1.msra.mxu0 0.0
  %206 = vmatprep.subr.mxu0 0.0
  %207 = vmatpush1.msra.mxu0 0.0
  %208 = vmatprep.subr.mxu0 0.0
  %209 = vmatpush1.msra.mxu0 0.0
  %210 = vmatprep.subr.mxu0 0.0
  %211 = vmatpush1.msra.mxu0 0.0
  %212 = vmatprep.subr.mxu0 0.0
  %213 = vmatpush1.msra.mxu0 0.0
  %214 = vmatprep.subr.mxu0 0.0
  %215 = vmatpush1.msra.mxu0 0.0
  %216 = vmatprep.subr.mxu0 0.0
  %217 = vmatpush1.msra.mxu0 0.0
  %218 = vmatprep.subr.mxu0 0.0
  %219 = vmatpush1.msra.mxu0 0.0
  %220 = vmatprep.subr.mxu0 0.0
  %221 = vmatpush1.msra.mxu0 0.0
  %222 = vmatprep.subr.mxu0 0.0
  %223 = vmatpush1.msra.mxu0 0.0
  %224 = vmatprep.subr.mxu0 0.0
  %225 = vmatpush1.msra.mxu0 0.0
  %226 = vmatprep.subr.mxu0 0.0
  %227 = vmatpush1.msra.mxu0 0.0
  %228 = vmatprep.mubr.f32.mxu0 0.0
  %v229 = vand.u32 %v64, 4294901760
  %230 = vmatmul.mubr.f32.gmra.mrb[0].mxu0 %v229
  %v231 = vpop.f32.mrb[0].mxu0
  %v232 = vadd.f32 %v146, %v231
  %v233 = vpop.f32.mrb[0].mxu0
  %234 = vmatprep.mubr.f32.mxu0 0.0
  %v235 = vand.u32 %v67, 4294901760
  %236 = vmatmul.mubr.f32.gmra.mrb[0].mxu0 %v235
  %v237 = vpop.f32.mrb[0].mxu0
  %v238 = vadd.f32 %v156, %v237
  %v239 = vpop.f32.mrb[0].mxu0
  %240 = vdwg.mxu0
  %241 = vmatprep.subr.mxu0 0.0
  %v242 = vand.u32 %v71, 4294901760
  %v243 = vsub.f32 %v71, %v242
  %244 = vmatpush1.msra.mxu0 %v243
  %245 = vmatprep.subr.mxu0 0.0
  %246 = vmatpush1.msra.mxu0 0.0
  %247 = vmatprep.subr.mxu0 0.0
  %248 = vmatpush1.msra.mxu0 0.0
  %249 = vmatprep.subr.mxu0 0.0
  %250 = vmatpush1.msra.mxu0 0.0
  %251 = vmatprep.subr.mxu0 0.0
  %252 = vmatpush1.msra.mxu0 0.0
  %253 = vmatprep.subr.mxu0 0.0
  %254 = vmatpush1.msra.mxu0 0.0
  %255 = vmatprep.subr.mxu0 0.0
  %256 = vmatpush1.msra.mxu0 0.0
  %257 = vmatprep.subr.mxu0 0.0
  %258 = vmatpush1.msra.mxu0 0.0
  %259 = vmatprep.subr.mxu0 0.0
  %260 = vmatpush1.msra.mxu0 0.0
  %261 = vmatprep.subr.mxu0 0.0
  %262 = vmatpush1.msra.mxu0 0.0
  %263 = vmatprep.subr.mxu0 0.0
  %264 = vmatpush1.msra.mxu0 0.0
  %265 = vmatprep.subr.mxu0 0.0
  %266 = vmatpush1.msra.mxu0 0.0
  %267 = vmatprep.subr.mxu0 0.0
  %268 = vmatpush1.msra.mxu0 0.0
  %269 = vmatprep.subr.mxu0 0.0
  %270 = vmatpush1.msra.mxu0 0.0
  %271 = vmatprep.subr.mxu0 0.0
  %272 = vmatpush1.msra.mxu0 0.0
  %273 = vmatprep.subr.mxu0 0.0
  %274 = vmatpush1.msra.mxu0 0.0
  %275 = vmatprep.subr.mxu0 0.0
  %276 = vmatpush1.msra.mxu0 0.0
  %277 = vmatprep.subr.mxu0 0.0
  %278 = vmatpush1.msra.mxu0 0.0
  %279 = vmatprep.subr.mxu0 0.0
  %280 = vmatpush1.msra.mxu0 0.0
  %281 = vmatprep.subr.mxu0 0.0
  %282 = vmatpush1.msra.mxu0 0.0
  %283 = vmatprep.subr.mxu0 0.0
  %284 = vmatpush1.msra.mxu0 0.0
  %285 = vmatprep.subr.mxu0 0.0
  %286 = vmatpush1.msra.mxu0 0.0
  %287 = vmatprep.subr.mxu0 0.0
  %288 = vmatpush1.msra.mxu0 0.0
  %289 = vmatprep.subr.mxu0 0.0
  %290 = vmatpush1.msra.mxu0 0.0
  %291 = vmatprep.subr.mxu0 0.0
  %292 = vmatpush1.msra.mxu0 0.0
  %293 = vmatprep.subr.mxu0 0.0
  %294 = vmatpush1.msra.mxu0 0.0
  %295 = vmatprep.subr.mxu0 0.0
  %296 = vmatpush1.msra.mxu0 0.0
  %297 = vmatprep.subr.mxu0 0.0
  %298 = vmatpush1.msra.mxu0 0.0
  %299 = vmatprep.subr.mxu0 0.0
  %300 = vmatpush1.msra.mxu0 0.0
  %301 = vmatprep.subr.mxu0 0.0
  %302 = vmatpush1.msra.mxu0 0.0
  %303 = vmatprep.subr.mxu0 0.0
  %304 = vmatpush1.msra.mxu0 0.0
  %305 = vmatprep.subr.mxu0 0.0
  %306 = vmatpush1.msra.mxu0 0.0
  %307 = vmatprep.mubr.f32.mxu0 0.0
  %v308 = vand.u32 %v64, 4294901760
  %v309 = vsub.f32 %v64, %v308
  %310 = vmatmul.mubr.f32.gmra.mrb[0].mxu0 %v309
  %v311 = vpop.f32.mrb[0].mxu0
  %v312 = vadd.f32 %v232, %v311
  %v313 = vpop.f32.mrb[0].mxu0
  %314 = vmatprep.mubr.f32.mxu0 0.0
  %v315 = vand.u32 %v67, 4294901760
  %v316 = vsub.f32 %v67, %v315
  %317 = vmatmul.mubr.f32.gmra.mrb[0].mxu0 %v316
  %v318 = vpop.f32.mrb[0].mxu0
  %v319 = vadd.f32 %v238, %v318
  %v320 = vpop.f32.mrb[0].mxu0
  %321 = vdwg.mxu0
  %322 = vmatprep.subr.mxu0 0.0
  %v323 = vand.u32 %v71, 4294901760
  %324 = vmatpush1.msra.mxu0 %v323
  %325 = vmatprep.subr.mxu0 0.0
  %326 = vmatpush1.msra.mxu0 0.0
  %327 = vmatprep.subr.mxu0 0.0
  %328 = vmatpush1.msra.mxu0 0.0
  %329 = vmatprep.subr.mxu0 0.0
  %330 = vmatpush1.msra.mxu0 0.0
  %331 = vmatprep.subr.mxu0 0.0
  %332 = vmatpush1.msra.mxu0 0.0
  %333 = vmatprep.subr.mxu0 0.0
  %334 = vmatpush1.msra.mxu0 0.0
  %335 = vmatprep.subr.mxu0 0.0
  %336 = vmatpush1.msra.mxu0 0.0
  %337 = vmatprep.subr.mxu0 0.0
  %338 = vmatpush1.msra.mxu0 0.0
  %339 = vmatprep.subr.mxu0 0.0
  %340 = vmatpush1.msra.mxu0 0.0
  %341 = vmatprep.subr.mxu0 0.0
  %342 = vmatpush1.msra.mxu0 0.0
  %343 = vmatprep.subr.mxu0 0.0
  %344 = vmatpush1.msra.mxu0 0.0
  %345 = vmatprep.subr.mxu0 0.0
  %346 = vmatpush1.msra.mxu0 0.0
  %347 = vmatprep.subr.mxu0 0.0
  %348 = vmatpush1.msra.mxu0 0.0
  %349 = vmatprep.subr.mxu0 0.0
  %350 = vmatpush1.msra.mxu0 0.0
  %351 = vmatprep.subr.mxu0 0.0
  %352 = vmatpush1.msra.mxu0 0.0
  %353 = vmatprep.subr.mxu0 0.0
  %354 = vmatpush1.msra.mxu0 0.0
  %355 = vmatprep.subr.mxu0 0.0
  %356 = vmatpush1.msra.mxu0 0.0
  %357 = vmatprep.subr.mxu0 0.0
  %358 = vmatpush1.msra.mxu0 0.0
  %359 = vmatprep.subr.mxu0 0.0
  %360 = vmatpush1.msra.mxu0 0.0
  %361 = vmatprep.subr.mxu0 0.0
  %362 = vmatpush1.msra.mxu0 0.0
  %363 = vmatprep.subr.mxu0 0.0
  %364 = vmatpush1.msra.mxu0 0.0
  %365 = vmatprep.subr.mxu0 0.0
  %366 = vmatpush1.msra.mxu0 0.0
  %367 = vmatprep.subr.mxu0 0.0
  %368 = vmatpush1.msra.mxu0 0.0
  %369 = vmatprep.subr.mxu0 0.0
  %370 = vmatpush1.msra.mxu0 0.0
  %371 = vmatprep.subr.mxu0 0.0
  %372 = vmatpush1.msra.mxu0 0.0
  %373 = vmatprep.subr.mxu0 0.0
  %374 = vmatpush1.msra.mxu0 0.0
  %375 = vmatprep.subr.mxu0 0.0
  %376 = vmatpush1.msra.mxu0 0.0
  %377 = vmatprep.subr.mxu0 0.0
  %378 = vmatpush1.msra.mxu0 0.0
  %379 = vmatprep.subr.mxu0 0.0
  %380 = vmatpush1.msra.mxu0 0.0
  %381 = vmatprep.subr.mxu0 0.0
  %382 = vmatpush1.msra.mxu0 0.0
  %383 = vmatprep.subr.mxu0 0.0
  %384 = vmatpush1.msra.mxu0 0.0
  %385 = vmatprep.subr.mxu0 0.0
  %386 = vmatpush1.msra.mxu0 0.0
  %387 = vmatprep.mubr.f32.mxu0 0.0
  %v388 = vand.u32 %v64, 4294901760
  %v389 = vsub.f32 %v64, %v388
  %v390 = vand.u32 %v389, 4294901760
  %391 = vmatmul.mubr.f32.gmra.mrb[0].mxu0 %v390
  %v392 = vpop.f32.mrb[0].mxu0
  %v393 = vadd.f32 %v312, %v392
  %v394 = vpop.f32.mrb[0].mxu0
  %395 = vmatprep.mubr.f32.mxu0 0.0
  %v396 = vand.u32 %v67, 4294901760
  %v397 = vsub.f32 %v67, %v396
  %v398 = vand.u32 %v397, 4294901760
  %399 = vmatmul.mubr.f32.gmra.mrb[0].mxu0 %v398
  %v400 = vpop.f32.mrb[0].mxu0
  %v401 = vadd.f32 %v319, %v400
  %v402 = vpop.f32.mrb[0].mxu0
  %403 = vdwg.mxu0
  %404 = vmatprep.subr.mxu0 0.0
  %v405 = vand.u32 %v71, 4294901760
  %v406 = vsub.f32 %v71, %v405
  %v407 = vand.u32 %v406, 4294901760
  %408 = vmatpush1.msra.mxu0 %v407
  %409 = vmatprep.subr.mxu0 0.0
  %410 = vmatpush1.msra.mxu0 0.0
  %411 = vmatprep.subr.mxu0 0.0
  %412 = vmatpush1.msra.mxu0 0.0
  %413 = vmatprep.subr.mxu0 0.0
  %414 = vmatpush1.msra.mxu0 0.0
  %415 = vmatprep.subr.mxu0 0.0
  %416 = vmatpush1.msra.mxu0 0.0
  %417 = vmatprep.subr.mxu0 0.0
  %418 = vmatpush1.msra.mxu0 0.0
  %419 = vmatprep.subr.mxu0 0.0
  %420 = vmatpush1.msra.mxu0 0.0
  %421 = vmatprep.subr.mxu0 0.0
  %422 = vmatpush1.msra.mxu0 0.0
  %423 = vmatprep.subr.mxu0 0.0
  %424 = vmatpush1.msra.mxu0 0.0
  %425 = vmatprep.subr.mxu0 0.0
  %426 = vmatpush1.msra.mxu0 0.0
  %427 = vmatprep.subr.mxu0 0.0
  %428 = vmatpush1.msra.mxu0 0.0
  %429 = vmatprep.subr.mxu0 0.0
  %430 = vmatpush1.msra.mxu0 0.0
  %431 = vmatprep.subr.mxu0 0.0
  %432 = vmatpush1.msra.mxu0 0.0
  %433 = vmatprep.subr.mxu0 0.0
  %434 = vmatpush1.msra.mxu0 0.0
  %435 = vmatprep.subr.mxu0 0.0
  %436 = vmatpush1.msra.mxu0 0.0
  %437 = vmatprep.subr.mxu0 0.0
  %438 = vmatpush1.msra.mxu0 0.0
  %439 = vmatprep.subr.mxu0 0.0
  %440 = vmatpush1.msra.mxu0 0.0
  %441 = vmatprep.subr.mxu0 0.0
  %442 = vmatpush1.msra.mxu0 0.0
  %443 = vmatprep.subr.mxu0 0.0
  %444 = vmatpush1.msra.mxu0 0.0
  %445 = vmatprep.subr.mxu0 0.0
  %446 = vmatpush1.msra.mxu0 0.0
  %447 = vmatprep.subr.mxu0 0.0
  %448 = vmatpush1.msra.mxu0 0.0
  %449 = vmatprep.subr.mxu0 0.0
  %450 = vmatpush1.msra.mxu0 0.0
  %451 = vmatprep.subr.mxu0 0.0
  %452 = vmatpush1.msra.mxu0 0.0
  %453 = vmatprep.subr.mxu0 0.0
  %454 = vmatpush1.msra.mxu0 0.0
  %455 = vmatprep.subr.mxu0 0.0
  %456 = vmatpush1.msra.mxu0 0.0
  %457 = vmatprep.subr.mxu0 0.0
  %458 = vmatpush1.msra.mxu0 0.0
  %459 = vmatprep.subr.mxu0 0.0
  %460 = vmatpush1.msra.mxu0 0.0
  %461 = vmatprep.subr.mxu0 0.0
  %462 = vmatpush1.msra.mxu0 0.0
  %463 = vmatprep.subr.mxu0 0.0
  %464 = vmatpush1.msra.mxu0 0.0
  %465 = vmatprep.subr.mxu0 0.0
  %466 = vmatpush1.msra.mxu0 0.0
  %467 = vmatprep.subr.mxu0 0.0
  %468 = vmatpush1.msra.mxu0 0.0
  %469 = vmatprep.subr.mxu0 0.0
  %470 = vmatpush1.msra.mxu0 0.0
  %471 = vmatprep.mubr.f32.mxu0 0.0
  %v472 = vand.u32 %v64, 4294901760
  %473 = vmatmul.mubr.f32.gmra.mrb[0].mxu0 %v472
  %v474 = vpop.f32.mrb[0].mxu0
  %v475 = vadd.f32 %v393, %v474
  %v476 = vpop.f32.mrb[0].mxu0
  %477 = vmatprep.mubr.f32.mxu0 0.0
  %v478 = vand.u32 %v67, 4294901760
  %479 = vmatmul.mubr.f32.gmra.mrb[0].mxu0 %v478
  %v480 = vpop.f32.mrb[0].mxu0
  %v481 = vadd.f32 %v401, %v480
  %v482 = vpop.f32.mrb[0].mxu0
  %483 = vdwg.mxu0
  %484 = vmatprep.subr.mxu0 0.0
  %v485 = vand.u32 %v71, 4294901760
  %486 = vmatpush1.msra.mxu0 %v485
  %487 = vmatprep.subr.mxu0 0.0
  %488 = vmatpush1.msra.mxu0 0.0
  %489 = vmatprep.subr.mxu0 0.0
  %490 = vmatpush1.msra.mxu0 0.0
  %491 = vmatprep.subr.mxu0 0.0
  %492 = vmatpush1.msra.mxu0 0.0
  %493 = vmatprep.subr.mxu0 0.0
  %494 = vmatpush1.msra.mxu0 0.0
  %495 = vmatprep.subr.mxu0 0.0
  %496 = vmatpush1.msra.mxu0 0.0
  %497 = vmatprep.subr.mxu0 0.0
  %498 = vmatpush1.msra.mxu0 0.0
  %499 = vmatprep.subr.mxu0 0.0
  %500 = vmatpush1.msra.mxu0 0.0
  %501 = vmatprep.subr.mxu0 0.0
  %502 = vmatpush1.msra.mxu0 0.0
  %503 = vmatprep.subr.mxu0 0.0
  %504 = vmatpush1.msra.mxu0 0.0
  %505 = vmatprep.subr.mxu0 0.0
  %506 = vmatpush1.msra.mxu0 0.0
  %507 = vmatprep.subr.mxu0 0.0
  %508 = vmatpush1.msra.mxu0 0.0
  %509 = vmatprep.subr.mxu0 0.0
  %510 = vmatpush1.msra.mxu0 0.0
  %511 = vmatprep.subr.mxu0 0.0
  %512 = vmatpush1.msra.mxu0 0.0
  %513 = vmatprep.subr.mxu0 0.0
  %514 = vmatpush1.msra.mxu0 0.0
  %515 = vmatprep.subr.mxu0 0.0
  %516 = vmatpush1.msra.mxu0 0.0
  %517 = vmatprep.subr.mxu0 0.0
  %518 = vmatpush1.msra.mxu0 0.0
  %519 = vmatprep.subr.mxu0 0.0
  %520 = vmatpush1.msra.mxu0 0.0
  %521 = vmatprep.subr.mxu0 0.0
  %522 = vmatpush1.msra.mxu0 0.0
  %523 = vmatprep.subr.mxu0 0.0
  %524 = vmatpush1.msra.mxu0 0.0
  %525 = vmatprep.subr.mxu0 0.0
  %526 = vmatpush1.msra.mxu0 0.0
  %527 = vmatprep.subr.mxu0 0.0
  %528 = vmatpush1.msra.mxu0 0.0
  %529 = vmatprep.subr.mxu0 0.0
  %530 = vmatpush1.msra.mxu0 0.0
  %531 = vmatprep.subr.mxu0 0.0
  %532 = vmatpush1.msra.mxu0 0.0
  %533 = vmatprep.subr.mxu0 0.0
  %534 = vmatpush1.msra.mxu0 0.0
  %535 = vmatprep.subr.mxu0 0.0
  %536 = vmatpush1.msra.mxu0 0.0
  %537 = vmatprep.subr.mxu0 0.0
  %538 = vmatpush1.msra.mxu0 0.0
  %539 = vmatprep.subr.mxu0 0.0
  %540 = vmatpush1.msra.mxu0 0.0
  %541 = vmatprep.subr.mxu0 0.0
  %542 = vmatpush1.msra.mxu0 0.0
  %543 = vmatprep.subr.mxu0 0.0
  %544 = vmatpush1.msra.mxu0 0.0
  %545 = vmatprep.subr.mxu0 0.0
  %546 = vmatpush1.msra.mxu0 0.0
  %547 = vmatprep.subr.mxu0 0.0
  %548 = vmatpush1.msra.mxu0 0.0
  %549 = vmatprep.mubr.f32.mxu0 0.0
  %v550 = vand.u32 %v64, 4294901760
  %551 = vmatmul.mubr.f32.gmra.mrb[0].mxu0 %v550
  %v552 = vpop.f32.mrb[0].mxu0
  %v553 = vadd.f32 %v475, %v552
  %v554 = vpop.f32.mrb[0].mxu0
  %555 = vmatprep.mubr.f32.mxu0 0.0
  %v556 = vand.u32 %v67, 4294901760
  %557 = vmatmul.mubr.f32.gmra.mrb[0].mxu0 %v556
  %v558 = vpop.f32.mrb[0].mxu0
  %v559 = vadd.f32 %v481, %v558
  %v560 = vpop.f32.mrb[0].mxu0
  %561 = vdwg.mxu0
  %v562 = vmax.f32 %v553, 0.0
  %v563 = vmax.f32 %v559, 0.0
  %vm564 = vcmask 97280
  %v566 = vsel %vm564, %v28, 0
  %v569 = vsel %vm564, %v29, 0
  %vm571 = vcmask 1043456
  %v573 = vsel %vm571, %v563, 0
  %575 = vmatprep.subr.mxu0 0.0
  %v576 = vand.u32 %v562, 4294901760
  %577 = vmatpush1.msra.mxu0 %v576
  %578 = vmatprep.subr.mxu0 0.0
  %v579 = vand.u32 %v573, 4294901760
  %580 = vmatpush1.msra.mxu0 %v579
  %581 = vmatprep.subr.mxu0 0.0
  %582 = vmatpush1.msra.mxu0 0.0
  %583 = vmatprep.subr.mxu0 0.0
  %584 = vmatpush1.msra.mxu0 0.0
  %585 = vmatprep.subr.mxu0 0.0
  %586 = vmatpush1.msra.mxu0 0.0
  %587 = vmatprep.subr.mxu0 0.0
  %588 = vmatpush1.msra.mxu0 0.0
  %589 = vmatprep.subr.mxu0 0.0
  %590 = vmatpush1.msra.mxu0 0.0
  %591 = vmatprep.subr.mxu0 0.0
  %592 = vmatpush1.msra.mxu0 0.0
  %593 = vmatprep.subr.mxu0 0.0
  %594 = vmatpush1.msra.mxu0 0.0
  %595 = vmatprep.subr.mxu0 0.0
  %596 = vmatpush1.msra.mxu0 0.0
  %597 = vmatprep.subr.mxu0 0.0
  %598 = vmatpush1.msra.mxu0 0.0
  %599 = vmatprep.subr.mxu0 0.0
  %600 = vmatpush1.msra.mxu0 0.0
  %601 = vmatprep.subr.mxu0 0.0
  %602 = vmatpush1.msra.mxu0 0.0
  %603 = vmatprep.subr.mxu0 0.0
  %604 = vmatpush1.msra.mxu0 0.0
  %605 = vmatprep.subr.mxu0 0.0
  %606 = vmatpush1.msra.mxu0 0.0
  %607 = vmatprep.subr.mxu0 0.0
  %608 = vmatpush1.msra.mxu0 0.0
  %609 = vmatprep.subr.mxu0 0.0
  %610 = vmatpush1.msra.mxu0 0.0
  %611 = vmatprep.subr.mxu0 0.0
  %612 = vmatpush1.msra.mxu0 0.0
  %613 = vmatprep.subr.mxu0 0.0
  %614 = vmatpush1.msra.mxu0 0.0
  %615 = vmatprep.subr.mxu0 0.0
  %616 = vmatpush1.msra.mxu0 0.0
  %617 = vmatprep.subr.mxu0 0.0
  %618 = vmatpush1.msra.mxu0 0.0
  %619 = vmatprep.subr.mxu0 0.0
  %620 = vmatpush1.msra.mxu0 0.0
  %621 = vmatprep.subr.mxu0 0.0
  %622 = vmatpush1.msra.mxu0 0.0
  %623 = vmatprep.subr.mxu0 0.0
  %624 = vmatpush1.msra.mxu0 0.0
  %625 = vmatprep.subr.mxu0 0.0
  %626 = vmatpush1.msra.mxu0 0.0
  %627 = vmatprep.subr.mxu0 0.0
  %628 = vmatpush1.msra.mxu0 0.0
  %629 = vmatprep.subr.mxu0 0.0
  %630 = vmatpush1.msra.mxu0 0.0
  %631 = vmatprep.subr.mxu0 0.0
  %632 = vmatpush1.msra.mxu0 0.0
  %633 = vmatprep.subr.mxu0 0.0
  %634 = vmatpush1.msra.mxu0 0.0
  %635 = vmatprep.subr.mxu0 0.0
  %636 = vmatpush1.msra.mxu0 0.0
  %637 = vmatprep.subr.mxu0 0.0
  %638 = vmatpush1.msra.mxu0 0.0
  %639 = vmatprep.subr.mxu0 0.0
  %640 = vmatpush1.msra.mxu0 0.0
  %641 = vmatprep.mubr.f32.mxu0 0.0
  %v642 = vand.u32 %v566, 4294901760
  %v643 = vsub.f32 %v566, %v642
  %v644 = vand.u32 %v643, 4294901760
  %v645 = vsub.f32 %v643, %v644
  %v646 = vand.u32 %v645, 4294901760
  %647 = vmatmul.mubr.f32.gmra.mrb[0].mxu0 %v646
  %v648 = vpop.f32.mrb[0].mxu0
  %v649 = vadd.f32 %v48, %v648
  %v650 = vpop.f32.mrb[0].mxu0
  %651 = vmatprep.mubr.f32.mxu0 0.0
  %v652 = vand.u32 %v569, 4294901760
  %v653 = vsub.f32 %v569, %v652
  %v654 = vand.u32 %v653, 4294901760
  %v655 = vsub.f32 %v653, %v654
  %v656 = vand.u32 %v655, 4294901760
  %657 = vmatmul.mubr.f32.gmra.mrb[0].mxu0 %v656
  %v658 = vpop.f32.mrb[0].mxu0
  %v659 = vadd.f32 %v53, %v658
  %v660 = vpop.f32.mrb[0].mxu0
  %661 = vdwg.mxu0
  %662 = vmatprep.subr.mxu0 0.0
  %v663 = vand.u32 %v562, 4294901760
  %v664 = vsub.f32 %v562, %v663
  %v665 = vand.u32 %v664, 4294901760
  %v666 = vsub.f32 %v664, %v665
  %v667 = vand.u32 %v666, 4294901760
  %668 = vmatpush1.msra.mxu0 %v667
  %669 = vmatprep.subr.mxu0 0.0
  %v670 = vand.u32 %v573, 4294901760
  %v671 = vsub.f32 %v573, %v670
  %v672 = vand.u32 %v671, 4294901760
  %v673 = vsub.f32 %v671, %v672
  %v674 = vand.u32 %v673, 4294901760
  %675 = vmatpush1.msra.mxu0 %v674
  %676 = vmatprep.subr.mxu0 0.0
  %677 = vmatpush1.msra.mxu0 0.0
  %678 = vmatprep.subr.mxu0 0.0
  %679 = vmatpush1.msra.mxu0 0.0
  %680 = vmatprep.subr.mxu0 0.0
  %681 = vmatpush1.msra.mxu0 0.0
  %682 = vmatprep.subr.mxu0 0.0
  %683 = vmatpush1.msra.mxu0 0.0
  %684 = vmatprep.subr.mxu0 0.0
  %685 = vmatpush1.msra.mxu0 0.0
  %686 = vmatprep.subr.mxu0 0.0
  %687 = vmatpush1.msra.mxu0 0.0
  %688 = vmatprep.subr.mxu0 0.0
  %689 = vmatpush1.msra.mxu0 0.0
  %690 = vmatprep.subr.mxu0 0.0
  %691 = vmatpush1.msra.mxu0 0.0
  %692 = vmatprep.subr.mxu0 0.0
  %693 = vmatpush1.msra.mxu0 0.0
  %694 = vmatprep.subr.mxu0 0.0
  %695 = vmatpush1.msra.mxu0 0.0
  %696 = vmatprep.subr.mxu0 0.0
  %697 = vmatpush1.msra.mxu0 0.0
  %698 = vmatprep.subr.mxu0 0.0
  %699 = vmatpush1.msra.mxu0 0.0
  %700 = vmatprep.subr.mxu0 0.0
  %701 = vmatpush1.msra.mxu0 0.0
  %702 = vmatprep.subr.mxu0 0.0
  %703 = vmatpush1.msra.mxu0 0.0
  %704 = vmatprep.subr.mxu0 0.0
  %705 = vmatpush1.msra.mxu0 0.0
  %706 = vmatprep.subr.mxu0 0.0
  %707 = vmatpush1.msra.mxu0 0.0
  %708 = vmatprep.subr.mxu0 0.0
  %709 = vmatpush1.msra.mxu0 0.0
  %710 = vmatprep.subr.mxu0 0.0
  %711 = vmatpush1.msra.mxu0 0.0
  %712 = vmatprep.subr.mxu0 0.0
  %713 = vmatpush1.msra.mxu0 0.0
  %714 = vmatprep.subr.mxu0 0.0
  %715 = vmatpush1.msra.mxu0 0.0
  %716 = vmatprep.subr.mxu0 0.0
  %717 = vmatpush1.msra.mxu0 0.0
  %718 = vmatprep.subr.mxu0 0.0
  %719 = vmatpush1.msra.mxu0 0.0
  %720 = vmatprep.subr.mxu0 0.0
  %721 = vmatpush1.msra.mxu0 0.0
  %722 = vmatprep.subr.mxu0 0.0
  %723 = vmatpush1.msra.mxu0 0.0
  %724 = vmatprep.subr.mxu0 0.0
  %725 = vmatpush1.msra.mxu0 0.0
  %726 = vmatprep.subr.mxu0 0.0
  %727 = vmatpush1.msra.mxu0 0.0
  %728 = vmatprep.subr.mxu0 0.0
  %729 = vmatpush1.msra.mxu0 0.0
  %730 = vmatprep.subr.mxu0 0.0
  %731 = vmatpush1.msra.mxu0 0.0
  %732 = vmatprep.subr.mxu0 0.0
  %733 = vmatpush1.msra.mxu0 0.0
  %734 = vmatprep.subr.mxu0 0.0
  %735 = vmatpush1.msra.mxu0 0.0
  %736 = vmatprep.mubr.f32.mxu0 0.0
  %v737 = vand.u32 %v566, 4294901760
  %738 = vmatmul.mubr.f32.gmra.mrb[0].mxu0 %v737
  %v739 = vpop.f32.mrb[0].mxu0
  %v740 = vadd.f32 %v649, %v739
  %v741 = vpop.f32.mrb[0].mxu0
  %742 = vmatprep.mubr.f32.mxu0 0.0
  %v743 = vand.u32 %v569, 4294901760
  %744 = vmatmul.mubr.f32.gmra.mrb[0].mxu0 %v743
  %v745 = vpop.f32.mrb[0].mxu0
  %v746 = vadd.f32 %v659, %v745
  %v747 = vpop.f32.mrb[0].mxu0
  %748 = vdwg.mxu0
  %749 = vmatprep.subr.mxu0 0.0
  %v750 = vand.u32 %v562, 4294901760
  %v751 = vsub.f32 %v562, %v750
  %752 = vmatpush1.msra.mxu0 %v751
  %753 = vmatprep.subr.mxu0 0.0
  %v754 = vand.u32 %v573, 4294901760
  %v755 = vsub.f32 %v573, %v754
  %756 = vmatpush1.msra.mxu0 %v755
  %757 = vmatprep.subr.mxu0 0.0
  %758 = vmatpush1.msra.mxu0 0.0
  %759 = vmatprep.subr.mxu0 0.0
  %760 = vmatpush1.msra.mxu0 0.0
  %761 = vmatprep.subr.mxu0 0.0
  %762 = vmatpush1.msra.mxu0 0.0
  %763 = vmatprep.subr.mxu0 0.0
  %764 = vmatpush1.msra.mxu0 0.0
  %765 = vmatprep.subr.mxu0 0.0
  %766 = vmatpush1.msra.mxu0 0.0
  %767 = vmatprep.subr.mxu0 0.0
  %768 = vmatpush1.msra.mxu0 0.0
  %769 = vmatprep.subr.mxu0 0.0
  %770 = vmatpush1.msra.mxu0 0.0
  %771 = vmatprep.subr.mxu0 0.0
  %772 = vmatpush1.msra.mxu0 0.0
  %773 = vmatprep.subr.mxu0 0.0
  %774 = vmatpush1.msra.mxu0 0.0
  %775 = vmatprep.subr.mxu0 0.0
  %776 = vmatpush1.msra.mxu0 0.0
  %777 = vmatprep.subr.mxu0 0.0
  %778 = vmatpush1.msra.mxu0 0.0
  %779 = vmatprep.subr.mxu0 0.0
  %780 = vmatpush1.msra.mxu0 0.0
  %781 = vmatprep.subr.mxu0 0.0
  %782 = vmatpush1.msra.mxu0 0.0
  %783 = vmatprep.subr.mxu0 0.0
  %784 = vmatpush1.msra.mxu0 0.0
  %785 = vmatprep.subr.mxu0 0.0
  %786 = vmatpush1.msra.mxu0 0.0
  %787 = vmatprep.subr.mxu0 0.0
  %788 = vmatpush1.msra.mxu0 0.0
  %789 = vmatprep.subr.mxu0 0.0
  %790 = vmatpush1.msra.mxu0 0.0
  %791 = vmatprep.subr.mxu0 0.0
  %792 = vmatpush1.msra.mxu0 0.0
  %793 = vmatprep.subr.mxu0 0.0
  %794 = vmatpush1.msra.mxu0 0.0
  %795 = vmatprep.subr.mxu0 0.0
  %796 = vmatpush1.msra.mxu0 0.0
  %797 = vmatprep.subr.mxu0 0.0
  %798 = vmatpush1.msra.mxu0 0.0
  %799 = vmatprep.subr.mxu0 0.0
  %800 = vmatpush1.msra.mxu0 0.0
  %801 = vmatprep.subr.mxu0 0.0
  %802 = vmatpush1.msra.mxu0 0.0
  %803 = vmatprep.subr.mxu0 0.0
  %804 = vmatpush1.msra.mxu0 0.0
  %805 = vmatprep.subr.mxu0 0.0
  %806 = vmatpush1.msra.mxu0 0.0
  %807 = vmatprep.subr.mxu0 0.0
  %808 = vmatpush1.msra.mxu0 0.0
  %809 = vmatprep.subr.mxu0 0.0
  %810 = vmatpush1.msra.mxu0 0.0
  %811 = vmatprep.subr.mxu0 0.0
  %812 = vmatpush1.msra.mxu0 0.0
  %813 = vmatprep.subr.mxu0 0.0
  %814 = vmatpush1.msra.mxu0 0.0
  %815 = vmatprep.subr.mxu0 0.0
  %816 = vmatpush1.msra.mxu0 0.0
  %817 = vmatprep.mubr.f32.mxu0 0.0
  %v818 = vand.u32 %v566, 4294901760
  %v819 = vsub.f32 %v566, %v818
  %820 = vmatmul.mubr.f32.gmra.mrb[0].mxu0 %v819
  %v821 = vpop.f32.mrb[0].mxu0
  %v822 = vadd.f32 %v740, %v821
  %v823 = vpop.f32.mrb[0].mxu0
  %824 = vmatprep.mubr.f32.mxu0 0.0
  %v825 = vand.u32 %v569, 4294901760
  %v826 = vsub.f32 %v569, %v825
  %827 = vmatmul.mubr.f32.gmra.mrb[0].mxu0 %v826
  %v828 = vpop.f32.mrb[0].mxu0
  %v829 = vadd.f32 %v746, %v828
  %v830 = vpop.f32.mrb[0].mxu0
  %831 = vdwg.mxu0
  %832 = vmatprep.subr.mxu0 0.0
  %v833 = vand.u32 %v562, 4294901760
  %834 = vmatpush1.msra.mxu0 %v833
  %835 = vmatprep.subr.mxu0 0.0
  %v836 = vand.u32 %v573, 4294901760
  %837 = vmatpush1.msra.mxu0 %v836
  %838 = vmatprep.subr.mxu0 0.0
  %839 = vmatpush1.msra.mxu0 0.0
  %840 = vmatprep.subr.mxu0 0.0
  %841 = vmatpush1.msra.mxu0 0.0
  %842 = vmatprep.subr.mxu0 0.0
  %843 = vmatpush1.msra.mxu0 0.0
  %844 = vmatprep.subr.mxu0 0.0
  %845 = vmatpush1.msra.mxu0 0.0
  %846 = vmatprep.subr.mxu0 0.0
  %847 = vmatpush1.msra.mxu0 0.0
  %848 = vmatprep.subr.mxu0 0.0
  %849 = vmatpush1.msra.mxu0 0.0
  %850 = vmatprep.subr.mxu0 0.0
  %851 = vmatpush1.msra.mxu0 0.0
  %852 = vmatprep.subr.mxu0 0.0
  %853 = vmatpush1.msra.mxu0 0.0
  %854 = vmatprep.subr.mxu0 0.0
  %855 = vmatpush1.msra.mxu0 0.0
  %856 = vmatprep.subr.mxu0 0.0
  %857 = vmatpush1.msra.mxu0 0.0
  %858 = vmatprep.subr.mxu0 0.0
  %859 = vmatpush1.msra.mxu0 0.0
  %860 = vmatprep.subr.mxu0 0.0
  %861 = vmatpush1.msra.mxu0 0.0
  %862 = vmatprep.subr.mxu0 0.0
  %863 = vmatpush1.msra.mxu0 0.0
  %864 = vmatprep.subr.mxu0 0.0
  %865 = vmatpush1.msra.mxu0 0.0
  %866 = vmatprep.subr.mxu0 0.0
  %867 = vmatpush1.msra.mxu0 0.0
  %868 = vmatprep.subr.mxu0 0.0
  %869 = vmatpush1.msra.mxu0 0.0
  %870 = vmatprep.subr.mxu0 0.0
  %871 = vmatpush1.msra.mxu0 0.0
  %872 = vmatprep.subr.mxu0 0.0
  %873 = vmatpush1.msra.mxu0 0.0
  %874 = vmatprep.subr.mxu0 0.0
  %875 = vmatpush1.msra.mxu0 0.0
  %876 = vmatprep.subr.mxu0 0.0
  %877 = vmatpush1.msra.mxu0 0.0
  %878 = vmatprep.subr.mxu0 0.0
  %879 = vmatpush1.msra.mxu0 0.0
  %880 = vmatprep.subr.mxu0 0.0
  %881 = vmatpush1.msra.mxu0 0.0
  %882 = vmatprep.subr.mxu0 0.0
  %883 = vmatpush1.msra.mxu0 0.0
  %884 = vmatprep.subr.mxu0 0.0
  %885 = vmatpush1.msra.mxu0 0.0
  %886 = vmatprep.subr.mxu0 0.0
  %887 = vmatpush1.msra.mxu0 0.0
  %888 = vmatprep.subr.mxu0 0.0
  %889 = vmatpush1.msra.mxu0 0.0
  %890 = vmatprep.subr.mxu0 0.0
  %891 = vmatpush1.msra.mxu0 0.0
  %892 = vmatprep.subr.mxu0 0.0
  %893 = vmatpush1.msra.mxu0 0.0
  %894 = vmatprep.subr.mxu0 0.0
  %895 = vmatpush1.msra.mxu0 0.0
  %896 = vmatprep.subr.mxu0 0.0
  %897 = vmatpush1.msra.mxu0 0.0
  %898 = vmatprep.mubr.f32.mxu0 0.0
  %v899 = vand.u32 %v566, 4294901760
  %v900 = vsub.f32 %v566, %v899
  %v901 = vand.u32 %v900, 4294901760
  %902 = vmatmul.mubr.f32.gmra.mrb[0].mxu0 %v901
  %v903 = vpop.f32.mrb[0].mxu0
  %v904 = vadd.f32 %v822, %v903
  %v905 = vpop.f32.mrb[0].mxu0
  %906 = vmatprep.mubr.f32.mxu0 0.0
  %v907 = vand.u32 %v569, 4294901760
  %v908 = vsub.f32 %v569, %v907
  %v909 = vand.u32 %v908, 4294901760
  %910 = vmatmul.mubr.f32.gmra.mrb[0].mxu0 %v909
  %v911 = vpop.f32.mrb[0].mxu0
  %v912 = vadd.f32 %v829, %v911
  %v913 = vpop.f32.mrb[0].mxu0
  %914 = vdwg.mxu0
  %915 = vmatprep.subr.mxu0 0.0
  %v916 = vand.u32 %v562, 4294901760
  %v917 = vsub.f32 %v562, %v916
  %v918 = vand.u32 %v917, 4294901760
  %919 = vmatpush1.msra.mxu0 %v918
  %920 = vmatprep.subr.mxu0 0.0
  %v921 = vand.u32 %v573, 4294901760
  %v922 = vsub.f32 %v573, %v921
  %v923 = vand.u32 %v922, 4294901760
  %924 = vmatpush1.msra.mxu0 %v923
  %925 = vmatprep.subr.mxu0 0.0
  %926 = vmatpush1.msra.mxu0 0.0
  %927 = vmatprep.subr.mxu0 0.0
  %928 = vmatpush1.msra.mxu0 0.0
  %929 = vmatprep.subr.mxu0 0.0
  %930 = vmatpush1.msra.mxu0 0.0
  %931 = vmatprep.subr.mxu0 0.0
  %932 = vmatpush1.msra.mxu0 0.0
  %933 = vmatprep.subr.mxu0 0.0
  %934 = vmatpush1.msra.mxu0 0.0
  %935 = vmatprep.subr.mxu0 0.0
  %936 = vmatpush1.msra.mxu0 0.0
  %937 = vmatprep.subr.mxu0 0.0
  %938 = vmatpush1.msra.mxu0 0.0
  %939 = vmatprep.subr.mxu0 0.0
  %940 = vmatpush1.msra.mxu0 0.0
  %941 = vmatprep.subr.mxu0 0.0
  %942 = vmatpush1.msra.mxu0 0.0
  %943 = vmatprep.subr.mxu0 0.0
  %944 = vmatpush1.msra.mxu0 0.0
  %945 = vmatprep.subr.mxu0 0.0
  %946 = vmatpush1.msra.mxu0 0.0
  %947 = vmatprep.subr.mxu0 0.0
  %948 = vmatpush1.msra.mxu0 0.0
  %949 = vmatprep.subr.mxu0 0.0
  %950 = vmatpush1.msra.mxu0 0.0
  %951 = vmatprep.subr.mxu0 0.0
  %952 = vmatpush1.msra.mxu0 0.0
  %953 = vmatprep.subr.mxu0 0.0
  %954 = vmatpush1.msra.mxu0 0.0
  %955 = vmatprep.subr.mxu0 0.0
  %956 = vmatpush1.msra.mxu0 0.0
  %957 = vmatprep.subr.mxu0 0.0
  %958 = vmatpush1.msra.mxu0 0.0
  %959 = vmatprep.subr.mxu0 0.0
  %960 = vmatpush1.msra.mxu0 0.0
  %961 = vmatprep.subr.mxu0 0.0
  %962 = vmatpush1.msra.mxu0 0.0
  %963 = vmatprep.subr.mxu0 0.0
  %964 = vmatpush1.msra.mxu0 0.0
  %965 = vmatprep.subr.mxu0 0.0
  %966 = vmatpush1.msra.mxu0 0.0
  %967 = vmatprep.subr.mxu0 0.0
  %968 = vmatpush1.msra.mxu0 0.0
  %969 = vmatprep.subr.mxu0 0.0
  %970 = vmatpush1.msra.mxu0 0.0
  %971 = vmatprep.subr.mxu0 0.0
  %972 = vmatpush1.msra.mxu0 0.0
  %973 = vmatprep.subr.mxu0 0.0
  %974 = vmatpush1.msra.mxu0 0.0
  %975 = vmatprep.subr.mxu0 0.0
  %976 = vmatpush1.msra.mxu0 0.0
  %977 = vmatprep.subr.mxu0 0.0
  %978 = vmatpush1.msra.mxu0 0.0
  %979 = vmatprep.subr.mxu0 0.0
  %980 = vmatpush1.msra.mxu0 0.0
  %981 = vmatprep.subr.mxu0 0.0
  %982 = vmatpush1.msra.mxu0 0.0
  %983 = vmatprep.subr.mxu0 0.0
  %984 = vmatpush1.msra.mxu0 0.0
  %985 = vmatprep.mubr.f32.mxu0 0.0
  %v986 = vand.u32 %v566, 4294901760
  %987 = vmatmul.mubr.f32.gmra.mrb[0].mxu0 %v986
  %v988 = vpop.f32.mrb[0].mxu0
  %v989 = vadd.f32 %v904, %v988
  %v990 = vpop.f32.mrb[0].mxu0
  %991 = vmatprep.mubr.f32.mxu0 0.0
  %v992 = vand.u32 %v569, 4294901760
  %993 = vmatmul.mubr.f32.gmra.mrb[0].mxu0 %v992
  %v994 = vpop.f32.mrb[0].mxu0
  %v995 = vadd.f32 %v912, %v994
  %v996 = vpop.f32.mrb[0].mxu0
  %997 = vdwg.mxu0
  %998 = vmatprep.subr.mxu0 0.0
  %v999 = vand.u32 %v562, 4294901760
  %1000 = vmatpush1.msra.mxu0 %v999
  %1001 = vmatprep.subr.mxu0 0.0
  %v1002 = vand.u32 %v573, 4294901760
  %1003 = vmatpush1.msra.mxu0 %v1002
  %1004 = vmatprep.subr.mxu0 0.0
  %1005 = vmatpush1.msra.mxu0 0.0
  %1006 = vmatprep.subr.mxu0 0.0
  %1007 = vmatpush1.msra.mxu0 0.0
  %1008 = vmatprep.subr.mxu0 0.0
  %1009 = vmatpush1.msra.mxu0 0.0
  %1010 = vmatprep.subr.mxu0 0.0
  %1011 = vmatpush1.msra.mxu0 0.0
  %1012 = vmatprep.subr.mxu0 0.0
  %1013 = vmatpush1.msra.mxu0 0.0
  %1014 = vmatprep.subr.mxu0 0.0
  %1015 = vmatpush1.msra.mxu0 0.0
  %1016 = vmatprep.subr.mxu0 0.0
  %1017 = vmatpush1.msra.mxu0 0.0
  %1018 = vmatprep.subr.mxu0 0.0
  %1019 = vmatpush1.msra.mxu0 0.0
  %1020 = vmatprep.subr.mxu0 0.0
  %1021 = vmatpush1.msra.mxu0 0.0
  %1022 = vmatprep.subr.mxu0 0.0
  %1023 = vmatpush1.msra.mxu0 0.0
  %1024 = vmatprep.subr.mxu0 0.0
  %1025 = vmatpush1.msra.mxu0 0.0
  %1026 = vmatprep.subr.mxu0 0.0
  %1027 = vmatpush1.msra.mxu0 0.0
  %1028 = vmatprep.subr.mxu0 0.0
  %1029 = vmatpush1.msra.mxu0 0.0
  %1030 = vmatprep.subr.mxu0 0.0
  %1031 = vmatpush1.msra.mxu0 0.0
  %1032 = vmatprep.subr.mxu0 0.0
  %1033 = vmatpush1.msra.mxu0 0.0
  %1034 = vmatprep.subr.mxu0 0.0
  %1035 = vmatpush1.msra.mxu0 0.0
  %1036 = vmatprep.subr.mxu0 0.0
  %1037 = vmatpush1.msra.mxu0 0.0
  %1038 = vmatprep.subr.mxu0 0.0
  %1039 = vmatpush1.msra.mxu0 0.0
  %1040 = vmatprep.subr.mxu0 0.0
  %1041 = vmatpush1.msra.mxu0 0.0
  %1042 = vmatprep.subr.mxu0 0.0
  %1043 = vmatpush1.msra.mxu0 0.0
  %1044 = vmatprep.subr.mxu0 0.0
  %1045 = vmatpush1.msra.mxu0 0.0
  %1046 = vmatprep.subr.mxu0 0.0
  %1047 = vmatpush1.msra.mxu0 0.0
  %1048 = vmatprep.subr.mxu0 0.0
  %1049 = vmatpush1.msra.mxu0 0.0
  %1050 = vmatprep.subr.mxu0 0.0
  %1051 = vmatpush1.msra.mxu0 0.0
  %1052 = vmatprep.subr.mxu0 0.0
  %1053 = vmatpush1.msra.mxu0 0.0
  %1054 = vmatprep.subr.mxu0 0.0
  %1055 = vmatpush1.msra.mxu0 0.0
  %1056 = vmatprep.subr.mxu0 0.0
  %1057 = vmatpush1.msra.mxu0 0.0
  %1058 = vmatprep.subr.mxu0 0.0
  %1059 = vmatpush1.msra.mxu0 0.0
  %1060 = vmatprep.subr.mxu0 0.0
  %1061 = vmatpush1.msra.mxu0 0.0
  %1062 = vmatprep.subr.mxu0 0.0
  %1063 = vmatpush1.msra.mxu0 0.0
  %1064 = vmatprep.mubr.f32.mxu0 0.0
  %v1065 = vand.u32 %v566, 4294901760
  %1066 = vmatmul.mubr.f32.gmra.mrb[0].mxu0 %v1065
  %v1067 = vpop.f32.mrb[0].mxu0
  %v1068 = vadd.f32 %v989, %v1067
  %v1069 = vpop.f32.mrb[0].mxu0
  %1070 = vmatprep.mubr.f32.mxu0 0.0
  %v1071 = vand.u32 %v569, 4294901760
  %1072 = vmatmul.mubr.f32.gmra.mrb[0].mxu0 %v1071
  %v1073 = vpop.f32.mrb[0].mxu0
  %v1074 = vadd.f32 %v995, %v1073
  %v1075 = vpop.f32.mrb[0].mxu0
  %1076 = vdwg.mxu0
  %v1077 = vmax.f32 %v1068, 0.0
  %v1078 = vmax.f32 %v1074, 0.0
  %v1080 = vsel %vm564, %v30, 0
  %v1083 = vsel %vm571, %v1078, 0
  %1085 = vmatprep.subr.mxu0 0.0
  %v1086 = vand.u32 %v1077, 4294901760
  %1087 = vmatpush1.msra.mxu0 %v1086
  %1088 = vmatprep.subr.mxu0 0.0
  %v1089 = vand.u32 %v1083, 4294901760
  %1090 = vmatpush1.msra.mxu0 %v1089
  %1091 = vmatprep.subr.mxu0 0.0
  %1092 = vmatpush1.msra.mxu0 0.0
  %1093 = vmatprep.subr.mxu0 0.0
  %1094 = vmatpush1.msra.mxu0 0.0
  %1095 = vmatprep.subr.mxu0 0.0
  %1096 = vmatpush1.msra.mxu0 0.0
  %1097 = vmatprep.subr.mxu0 0.0
  %1098 = vmatpush1.msra.mxu0 0.0
  %1099 = vmatprep.subr.mxu0 0.0
  %1100 = vmatpush1.msra.mxu0 0.0
  %1101 = vmatprep.subr.mxu0 0.0
  %1102 = vmatpush1.msra.mxu0 0.0
  %1103 = vmatprep.subr.mxu0 0.0
  %1104 = vmatpush1.msra.mxu0 0.0
  %1105 = vmatprep.subr.mxu0 0.0
  %1106 = vmatpush1.msra.mxu0 0.0
  %1107 = vmatprep.subr.mxu0 0.0
  %1108 = vmatpush1.msra.mxu0 0.0
  %1109 = vmatprep.subr.mxu0 0.0
  %1110 = vmatpush1.msra.mxu0 0.0
  %1111 = vmatprep.subr.mxu0 0.0
  %1112 = vmatpush1.msra.mxu0 0.0
  %1113 = vmatprep.subr.mxu0 0.0
  %1114 = vmatpush1.msra.mxu0 0.0
  %1115 = vmatprep.subr.mxu0 0.0
  %1116 = vmatpush1.msra.mxu0 0.0
  %1117 = vmatprep.subr.mxu0 0.0
  %1118 = vmatpush1.msra.mxu0 0.0
  %1119 = vmatprep.subr.mxu0 0.0
  %1120 = vmatpush1.msra.mxu0 0.0
  %1121 = vmatprep.subr.mxu0 0.0
  %1122 = vmatpush1.msra.mxu0 0.0
  %1123 = vmatprep.subr.mxu0 0.0
  %1124 = vmatpush1.msra.mxu0 0.0
  %1125 = vmatprep.subr.mxu0 0.0
  %1126 = vmatpush1.msra.mxu0 0.0
  %1127 = vmatprep.subr.mxu0 0.0
  %1128 = vmatpush1.msra.mxu0 0.0
  %1129 = vmatprep.subr.mxu0 0.0
  %1130 = vmatpush1.msra.mxu0 0.0
  %1131 = vmatprep.subr.mxu0 0.0
  %1132 = vmatpush1.msra.mxu0 0.0
  %1133 = vmatprep.subr.mxu0 0.0
  %1134 = vmatpush1.msra.mxu0 0.0
  %1135 = vmatprep.subr.mxu0 0.0
  %1136 = vmatpush1.msra.mxu0 0.0
  %1137 = vmatprep.subr.mxu0 0.0
  %1138 = vmatpush1.msra.mxu0 0.0
  %1139 = vmatprep.subr.mxu0 0.0
  %1140 = vmatpush1.msra.mxu0 0.0
  %1141 = vmatprep.subr.mxu0 0.0
  %1142 = vmatpush1.msra.mxu0 0.0
  %1143 = vmatprep.subr.mxu0 0.0
  %1144 = vmatpush1.msra.mxu0 0.0
  %1145 = vmatprep.subr.mxu0 0.0
  %1146 = vmatpush1.msra.mxu0 0.0
  %1147 = vmatprep.subr.mxu0 0.0
  %1148 = vmatpush1.msra.mxu0 0.0
  %1149 = vmatprep.subr.mxu0 0.0
  %1150 = vmatpush1.msra.mxu0 0.0
  %1151 = vmatprep.mubr.f32.mxu0 0.0
  %v1152 = vand.u32 %v1080, 4294901760
  %v1153 = vsub.f32 %v1080, %v1152
  %v1154 = vand.u32 %v1153, 4294901760
  %v1155 = vsub.f32 %v1153, %v1154
  %v1156 = vand.u32 %v1155, 4294901760
  %1157 = vmatmul.mubr.f32.gmra.mrb[0].mxu0 %v1156
  %v1158 = vpop.f32.mrb[0].mxu0
  %v1159 = vadd.f32 %v59, %v1158
  %v1160 = vpop.f32.mrb[0].mxu0
  %1161 = vdwg.mxu0
  %1162 = vmatprep.subr.mxu0 0.0
  %v1163 = vand.u32 %v1077, 4294901760
  %v1164 = vsub.f32 %v1077, %v1163
  %v1165 = vand.u32 %v1164, 4294901760
  %v1166 = vsub.f32 %v1164, %v1165
  %v1167 = vand.u32 %v1166, 4294901760
  %1168 = vmatpush1.msra.mxu0 %v1167
  %1169 = vmatprep.subr.mxu0 0.0
  %v1170 = vand.u32 %v1083, 4294901760
  %v1171 = vsub.f32 %v1083, %v1170
  %v1172 = vand.u32 %v1171, 4294901760
  %v1173 = vsub.f32 %v1171, %v1172
  %v1174 = vand.u32 %v1173, 4294901760
  %1175 = vmatpush1.msra.mxu0 %v1174
  %1176 = vmatprep.subr.mxu0 0.0
  %1177 = vmatpush1.msra.mxu0 0.0
  %1178 = vmatprep.subr.mxu0 0.0
  %1179 = vmatpush1.msra.mxu0 0.0
  %1180 = vmatprep.subr.mxu0 0.0
  %1181 = vmatpush1.msra.mxu0 0.0
  %1182 = vmatprep.subr.mxu0 0.0
  %1183 = vmatpush1.msra.mxu0 0.0
  %1184 = vmatprep.subr.mxu0 0.0
  %1185 = vmatpush1.msra.mxu0 0.0
  %1186 = vmatprep.subr.mxu0 0.0
  %1187 = vmatpush1.msra.mxu0 0.0
  %1188 = vmatprep.subr.mxu0 0.0
  %1189 = vmatpush1.msra.mxu0 0.0
  %1190 = vmatprep.subr.mxu0 0.0
  %1191 = vmatpush1.msra.mxu0 0.0
  %1192 = vmatprep.subr.mxu0 0.0
  %1193 = vmatpush1.msra.mxu0 0.0
  %1194 = vmatprep.subr.mxu0 0.0
  %1195 = vmatpush1.msra.mxu0 0.0
  %1196 = vmatprep.subr.mxu0 0.0
  %1197 = vmatpush1.msra.mxu0 0.0
  %1198 = vmatprep.subr.mxu0 0.0
  %1199 = vmatpush1.msra.mxu0 0.0
  %1200 = vmatprep.subr.mxu0 0.0
  %1201 = vmatpush1.msra.mxu0 0.0
  %1202 = vmatprep.subr.mxu0 0.0
  %1203 = vmatpush1.msra.mxu0 0.0
  %1204 = vmatprep.subr.mxu0 0.0
  %1205 = vmatpush1.msra.mxu0 0.0
  %1206 = vmatprep.subr.mxu0 0.0
  %1207 = vmatpush1.msra.mxu0 0.0
  %1208 = vmatprep.subr.mxu0 0.0
  %1209 = vmatpush1.msra.mxu0 0.0
  %1210 = vmatprep.subr.mxu0 0.0
  %1211 = vmatpush1.msra.mxu0 0.0
  %1212 = vmatprep.subr.mxu0 0.0
  %1213 = vmatpush1.msra.mxu0 0.0
  %1214 = vmatprep.subr.mxu0 0.0
  %1215 = vmatpush1.msra.mxu0 0.0
  %1216 = vmatprep.subr.mxu0 0.0
  %1217 = vmatpush1.msra.mxu0 0.0
  %1218 = vmatprep.subr.mxu0 0.0
  %1219 = vmatpush1.msra.mxu0 0.0
  %1220 = vmatprep.subr.mxu0 0.0
  %1221 = vmatpush1.msra.mxu0 0.0
  %1222 = vmatprep.subr.mxu0 0.0
  %1223 = vmatpush1.msra.mxu0 0.0
  %1224 = vmatprep.subr.mxu0 0.0
  %1225 = vmatpush1.msra.mxu0 0.0
  %1226 = vmatprep.subr.mxu0 0.0
  %1227 = vmatpush1.msra.mxu0 0.0
  %1228 = vmatprep.subr.mxu0 0.0
  %1229 = vmatpush1.msra.mxu0 0.0
  %1230 = vmatprep.subr.mxu0 0.0
  %1231 = vmatpush1.msra.mxu0 0.0
  %1232 = vmatprep.subr.mxu0 0.0
  %1233 = vmatpush1.msra.mxu0 0.0
  %1234 = vmatprep.subr.mxu0 0.0
  %1235 = vmatpush1.msra.mxu0 0.0
  %1236 = vmatprep.mubr.f32.mxu0 0.0
  %v1237 = vand.u32 %v1080, 4294901760
  %1238 = vmatmul.mubr.f32.gmra.mrb[0].mxu0 %v1237
  %v1239 = vpop.f32.mrb[0].mxu0
  %v1240 = vadd.f32 %v1159, %v1239
  %v1241 = vpop.f32.mrb[0].mxu0
  %1242 = vdwg.mxu0
  %1243 = vmatprep.subr.mxu0 0.0
  %v1244 = vand.u32 %v1077, 4294901760
  %v1245 = vsub.f32 %v1077, %v1244
  %1246 = vmatpush1.msra.mxu0 %v1245
  %1247 = vmatprep.subr.mxu0 0.0
  %v1248 = vand.u32 %v1083, 4294901760
  %v1249 = vsub.f32 %v1083, %v1248
  %1250 = vmatpush1.msra.mxu0 %v1249
  %1251 = vmatprep.subr.mxu0 0.0
  %1252 = vmatpush1.msra.mxu0 0.0
  %1253 = vmatprep.subr.mxu0 0.0
  %1254 = vmatpush1.msra.mxu0 0.0
  %1255 = vmatprep.subr.mxu0 0.0
  %1256 = vmatpush1.msra.mxu0 0.0
  %1257 = vmatprep.subr.mxu0 0.0
  %1258 = vmatpush1.msra.mxu0 0.0
  %1259 = vmatprep.subr.mxu0 0.0
  %1260 = vmatpush1.msra.mxu0 0.0
  %1261 = vmatprep.subr.mxu0 0.0
  %1262 = vmatpush1.msra.mxu0 0.0
  %1263 = vmatprep.subr.mxu0 0.0
  %1264 = vmatpush1.msra.mxu0 0.0
  %1265 = vmatprep.subr.mxu0 0.0
  %1266 = vmatpush1.msra.mxu0 0.0
  %1267 = vmatprep.subr.mxu0 0.0
  %1268 = vmatpush1.msra.mxu0 0.0
  %1269 = vmatprep.subr.mxu0 0.0
  %1270 = vmatpush1.msra.mxu0 0.0
  %1271 = vmatprep.subr.mxu0 0.0
  %1272 = vmatpush1.msra.mxu0 0.0
  %1273 = vmatprep.subr.mxu0 0.0
  %1274 = vmatpush1.msra.mxu0 0.0
  %1275 = vmatprep.subr.mxu0 0.0
  %1276 = vmatpush1.msra.mxu0 0.0
  %1277 = vmatprep.subr.mxu0 0.0
  %1278 = vmatpush1.msra.mxu0 0.0
  %1279 = vmatprep.subr.mxu0 0.0
  %1280 = vmatpush1.msra.mxu0 0.0
  %1281 = vmatprep.subr.mxu0 0.0
  %1282 = vmatpush1.msra.mxu0 0.0
  %1283 = vmatprep.subr.mxu0 0.0
  %1284 = vmatpush1.msra.mxu0 0.0
  %1285 = vmatprep.subr.mxu0 0.0
  %1286 = vmatpush1.msra.mxu0 0.0
  %1287 = vmatprep.subr.mxu0 0.0
  %1288 = vmatpush1.msra.mxu0 0.0
  %1289 = vmatprep.subr.mxu0 0.0
  %1290 = vmatpush1.msra.mxu0 0.0
  %1291 = vmatprep.subr.mxu0 0.0
  %1292 = vmatpush1.msra.mxu0 0.0
  %1293 = vmatprep.subr.mxu0 0.0
  %1294 = vmatpush1.msra.mxu0 0.0
  %1295 = vmatprep.subr.mxu0 0.0
  %1296 = vmatpush1.msra.mxu0 0.0
  %1297 = vmatprep.subr.mxu0 0.0
  %1298 = vmatpush1.msra.mxu0 0.0
  %1299 = vmatprep.subr.mxu0 0.0
  %1300 = vmatpush1.msra.mxu0 0.0
  %1301 = vmatprep.subr.mxu0 0.0
  %1302 = vmatpush1.msra.mxu0 0.0
  %1303 = vmatprep.subr.mxu0 0.0
  %1304 = vmatpush1.msra.mxu0 0.0
  %1305 = vmatprep.subr.mxu0 0.0
  %1306 = vmatpush1.msra.mxu0 0.0
  %1307 = vmatprep.subr.mxu0 0.0
  %1308 = vmatpush1.msra.mxu0 0.0
  %1309 = vmatprep.subr.mxu0 0.0
  %1310 = vmatpush1.msra.mxu0 0.0
  %1311 = vmatprep.mubr.f32.mxu0 0.0
  %v1312 = vand.u32 %v1080, 4294901760
  %v1313 = vsub.f32 %v1080, %v1312
  %1314 = vmatmul.mubr.f32.gmra.mrb[0].mxu0 %v1313
  %v1315 = vpop.f32.mrb[0].mxu0
  %v1316 = vadd.f32 %v1240, %v1315
  %v1317 = vpop.f32.mrb[0].mxu0
  %1318 = vdwg.mxu0
  %1319 = vmatprep.subr.mxu0 0.0
  %v1320 = vand.u32 %v1077, 4294901760
  %1321 = vmatpush1.msra.mxu0 %v1320
  %1322 = vmatprep.subr.mxu0 0.0
  %v1323 = vand.u32 %v1083, 4294901760
  %1324 = vmatpush1.msra.mxu0 %v1323
  %1325 = vmatprep.subr.mxu0 0.0
  %1326 = vmatpush1.msra.mxu0 0.0
  %1327 = vmatprep.subr.mxu0 0.0
  %1328 = vmatpush1.msra.mxu0 0.0
  %1329 = vmatprep.subr.mxu0 0.0
  %1330 = vmatpush1.msra.mxu0 0.0
  %1331 = vmatprep.subr.mxu0 0.0
  %1332 = vmatpush1.msra.mxu0 0.0
  %1333 = vmatprep.subr.mxu0 0.0
  %1334 = vmatpush1.msra.mxu0 0.0
  %1335 = vmatprep.subr.mxu0 0.0
  %1336 = vmatpush1.msra.mxu0 0.0
  %1337 = vmatprep.subr.mxu0 0.0
  %1338 = vmatpush1.msra.mxu0 0.0
  %1339 = vmatprep.subr.mxu0 0.0
  %1340 = vmatpush1.msra.mxu0 0.0
  %1341 = vmatprep.subr.mxu0 0.0
  %1342 = vmatpush1.msra.mxu0 0.0
  %1343 = vmatprep.subr.mxu0 0.0
  %1344 = vmatpush1.msra.mxu0 0.0
  %1345 = vmatprep.subr.mxu0 0.0
  %1346 = vmatpush1.msra.mxu0 0.0
  %1347 = vmatprep.subr.mxu0 0.0
  %1348 = vmatpush1.msra.mxu0 0.0
  %1349 = vmatprep.subr.mxu0 0.0
  %1350 = vmatpush1.msra.mxu0 0.0
  %1351 = vmatprep.subr.mxu0 0.0
  %1352 = vmatpush1.msra.mxu0 0.0
  %1353 = vmatprep.subr.mxu0 0.0
  %1354 = vmatpush1.msra.mxu0 0.0
  %1355 = vmatprep.subr.mxu0 0.0
  %1356 = vmatpush1.msra.mxu0 0.0
  %1357 = vmatprep.subr.mxu0 0.0
  %1358 = vmatpush1.msra.mxu0 0.0
  %1359 = vmatprep.subr.mxu0 0.0
  %1360 = vmatpush1.msra.mxu0 0.0
  %1361 = vmatprep.subr.mxu0 0.0
  %1362 = vmatpush1.msra.mxu0 0.0
  %1363 = vmatprep.subr.mxu0 0.0
  %1364 = vmatpush1.msra.mxu0 0.0
  %1365 = vmatprep.subr.mxu0 0.0
  %1366 = vmatpush1.msra.mxu0 0.0
  %1367 = vmatprep.subr.mxu0 0.0
  %1368 = vmatpush1.msra.mxu0 0.0
  %1369 = vmatprep.subr.mxu0 0.0
  %1370 = vmatpush1.msra.mxu0 0.0
  %1371 = vmatprep.subr.mxu0 0.0
  %1372 = vmatpush1.msra.mxu0 0.0
  %1373 = vmatprep.subr.mxu0 0.0
  %1374 = vmatpush1.msra.mxu0 0.0
  %1375 = vmatprep.subr.mxu0 0.0
  %1376 = vmatpush1.msra.mxu0 0.0
  %1377 = vmatprep.subr.mxu0 0.0
  %1378 = vmatpush1.msra.mxu0 0.0
  %1379 = vmatprep.subr.mxu0 0.0
  %1380 = vmatpush1.msra.mxu0 0.0
  %1381 = vmatprep.subr.mxu0 0.0
  %1382 = vmatpush1.msra.mxu0 0.0
  %1383 = vmatprep.subr.mxu0 0.0
  %1384 = vmatpush1.msra.mxu0 0.0
  %1385 = vmatprep.mubr.f32.mxu0 0.0
  %v1386 = vand.u32 %v1080, 4294901760
  %v1387 = vsub.f32 %v1080, %v1386
  %v1388 = vand.u32 %v1387, 4294901760
  %1389 = vmatmul.mubr.f32.gmra.mrb[0].mxu0 %v1388
  %v1390 = vpop.f32.mrb[0].mxu0
  %v1391 = vadd.f32 %v1316, %v1390
  %v1392 = vpop.f32.mrb[0].mxu0
  %1393 = vdwg.mxu0
  %1394 = vmatprep.subr.mxu0 0.0
  %v1395 = vand.u32 %v1077, 4294901760
  %v1396 = vsub.f32 %v1077, %v1395
  %v1397 = vand.u32 %v1396, 4294901760
  %1398 = vmatpush1.msra.mxu0 %v1397
  %1399 = vmatprep.subr.mxu0 0.0
  %v1400 = vand.u32 %v1083, 4294901760
  %v1401 = vsub.f32 %v1083, %v1400
  %v1402 = vand.u32 %v1401, 4294901760
  %1403 = vmatpush1.msra.mxu0 %v1402
  %1404 = vmatprep.subr.mxu0 0.0
  %1405 = vmatpush1.msra.mxu0 0.0
  %1406 = vmatprep.subr.mxu0 0.0
  %1407 = vmatpush1.msra.mxu0 0.0
  %1408 = vmatprep.subr.mxu0 0.0
  %1409 = vmatpush1.msra.mxu0 0.0
  %1410 = vmatprep.subr.mxu0 0.0
  %1411 = vmatpush1.msra.mxu0 0.0
  %1412 = vmatprep.subr.mxu0 0.0
  %1413 = vmatpush1.msra.mxu0 0.0
  %1414 = vmatprep.subr.mxu0 0.0
  %1415 = vmatpush1.msra.mxu0 0.0
  %1416 = vmatprep.subr.mxu0 0.0
  %1417 = vmatpush1.msra.mxu0 0.0
  %1418 = vmatprep.subr.mxu0 0.0
  %1419 = vmatpush1.msra.mxu0 0.0
  %1420 = vmatprep.subr.mxu0 0.0
  %1421 = vmatpush1.msra.mxu0 0.0
  %1422 = vmatprep.subr.mxu0 0.0
  %1423 = vmatpush1.msra.mxu0 0.0
  %1424 = vmatprep.subr.mxu0 0.0
  %1425 = vmatpush1.msra.mxu0 0.0
  %1426 = vmatprep.subr.mxu0 0.0
  %1427 = vmatpush1.msra.mxu0 0.0
  %1428 = vmatprep.subr.mxu0 0.0
  %1429 = vmatpush1.msra.mxu0 0.0
  %1430 = vmatprep.subr.mxu0 0.0
  %1431 = vmatpush1.msra.mxu0 0.0
  %1432 = vmatprep.subr.mxu0 0.0
  %1433 = vmatpush1.msra.mxu0 0.0
  %1434 = vmatprep.subr.mxu0 0.0
  %1435 = vmatpush1.msra.mxu0 0.0
  %1436 = vmatprep.subr.mxu0 0.0
  %1437 = vmatpush1.msra.mxu0 0.0
  %1438 = vmatprep.subr.mxu0 0.0
  %1439 = vmatpush1.msra.mxu0 0.0
  %1440 = vmatprep.subr.mxu0 0.0
  %1441 = vmatpush1.msra.mxu0 0.0
  %1442 = vmatprep.subr.mxu0 0.0
  %1443 = vmatpush1.msra.mxu0 0.0
  %1444 = vmatprep.subr.mxu0 0.0
  %1445 = vmatpush1.msra.mxu0 0.0
  %1446 = vmatprep.subr.mxu0 0.0
  %1447 = vmatpush1.msra.mxu0 0.0
  %1448 = vmatprep.subr.mxu0 0.0
  %1449 = vmatpush1.msra.mxu0 0.0
  %1450 = vmatprep.subr.mxu0 0.0
  %1451 = vmatpush1.msra.mxu0 0.0
  %1452 = vmatprep.subr.mxu0 0.0
  %1453 = vmatpush1.msra.mxu0 0.0
  %1454 = vmatprep.subr.mxu0 0.0
  %1455 = vmatpush1.msra.mxu0 0.0
  %1456 = vmatprep.subr.mxu0 0.0
  %1457 = vmatpush1.msra.mxu0 0.0
  %1458 = vmatprep.subr.mxu0 0.0
  %1459 = vmatpush1.msra.mxu0 0.0
  %1460 = vmatprep.subr.mxu0 0.0
  %1461 = vmatpush1.msra.mxu0 0.0
  %1462 = vmatprep.subr.mxu0 0.0
  %1463 = vmatpush1.msra.mxu0 0.0
  %1464 = vmatprep.mubr.f32.mxu0 0.0
  %v1465 = vand.u32 %v1080, 4294901760
  %1466 = vmatmul.mubr.f32.gmra.mrb[0].mxu0 %v1465
  %v1467 = vpop.f32.mrb[0].mxu0
  %v1468 = vadd.f32 %v1391, %v1467
  %v1469 = vpop.f32.mrb[0].mxu0
  %1470 = vdwg.mxu0
  %1471 = vmatprep.subr.mxu0 0.0
  %v1472 = vand.u32 %v1077, 4294901760
  %1473 = vmatpush1.msra.mxu0 %v1472
  %1474 = vmatprep.subr.mxu0 0.0
  %v1475 = vand.u32 %v1083, 4294901760
  %1476 = vmatpush1.msra.mxu0 %v1475
  %1477 = vmatprep.subr.mxu0 0.0
  %1478 = vmatpush1.msra.mxu0 0.0
  %1479 = vmatprep.subr.mxu0 0.0
  %1480 = vmatpush1.msra.mxu0 0.0
  %1481 = vmatprep.subr.mxu0 0.0
  %1482 = vmatpush1.msra.mxu0 0.0
  %1483 = vmatprep.subr.mxu0 0.0
  %1484 = vmatpush1.msra.mxu0 0.0
  %1485 = vmatprep.subr.mxu0 0.0
  %1486 = vmatpush1.msra.mxu0 0.0
  %1487 = vmatprep.subr.mxu0 0.0
  %1488 = vmatpush1.msra.mxu0 0.0
  %1489 = vmatprep.subr.mxu0 0.0
  %1490 = vmatpush1.msra.mxu0 0.0
  %1491 = vmatprep.subr.mxu0 0.0
  %1492 = vmatpush1.msra.mxu0 0.0
  %1493 = vmatprep.subr.mxu0 0.0
  %1494 = vmatpush1.msra.mxu0 0.0
  %1495 = vmatprep.subr.mxu0 0.0
  %1496 = vmatpush1.msra.mxu0 0.0
  %1497 = vmatprep.subr.mxu0 0.0
  %1498 = vmatpush1.msra.mxu0 0.0
  %1499 = vmatprep.subr.mxu0 0.0
  %1500 = vmatpush1.msra.mxu0 0.0
  %1501 = vmatprep.subr.mxu0 0.0
  %1502 = vmatpush1.msra.mxu0 0.0
  %1503 = vmatprep.subr.mxu0 0.0
  %1504 = vmatpush1.msra.mxu0 0.0
  %1505 = vmatprep.subr.mxu0 0.0
  %1506 = vmatpush1.msra.mxu0 0.0
  %1507 = vmatprep.subr.mxu0 0.0
  %1508 = vmatpush1.msra.mxu0 0.0
  %1509 = vmatprep.subr.mxu0 0.0
  %1510 = vmatpush1.msra.mxu0 0.0
  %1511 = vmatprep.subr.mxu0 0.0
  %1512 = vmatpush1.msra.mxu0 0.0
  %1513 = vmatprep.subr.mxu0 0.0
  %1514 = vmatpush1.msra.mxu0 0.0
  %1515 = vmatprep.subr.mxu0 0.0
  %1516 = vmatpush1.msra.mxu0 0.0
  %1517 = vmatprep.subr.mxu0 0.0
  %1518 = vmatpush1.msra.mxu0 0.0
  %1519 = vmatprep.subr.mxu0 0.0
  %1520 = vmatpush1.msra.mxu0 0.0
  %1521 = vmatprep.subr.mxu0 0.0
  %1522 = vmatpush1.msra.mxu0 0.0
  %1523 = vmatprep.subr.mxu0 0.0
  %1524 = vmatpush1.msra.mxu0 0.0
  %1525 = vmatprep.subr.mxu0 0.0
  %1526 = vmatpush1.msra.mxu0 0.0
  %1527 = vmatprep.subr.mxu0 0.0
  %1528 = vmatpush1.msra.mxu0 0.0
  %1529 = vmatprep.subr.mxu0 0.0
  %1530 = vmatpush1.msra.mxu0 0.0
  %1531 = vmatprep.subr.mxu0 0.0
  %1532 = vmatpush1.msra.mxu0 0.0
  %1533 = vmatprep.subr.mxu0 0.0
  %1534 = vmatpush1.msra.mxu0 0.0
  %1535 = vmatprep.subr.mxu0 0.0
  %1536 = vmatpush1.msra.mxu0 0.0
  %1537 = vmatprep.mubr.f32.mxu0 0.0
  %v1538 = vand.u32 %v1080, 4294901760
  %1539 = vmatmul.mubr.f32.gmra.mrb[0].mxu0 %v1538
  %v1540 = vpop.f32.mrb[0].mxu0
  %v1541 = vadd.f32 %v1468, %v1540
  %v1542 = vpop.f32.mrb[0].mxu0
  %1543 = vdwg.mxu0
  %1544 = vst [vmem:[%s7] sm:$0x7] %v1541
  // Predicated region
  $region30: #{neural_net_forward.1} parent=0 // pred_check
    _
  $region31: #{neural_net_forward.1} parent=0 // pred_check_branch
    %1546 = sbr.rel (0) target = $region33
  $region32: #{neural_net_forward.1} parent=0 // pred_region
    _
  $region33: #{neural_net_forward.1} parent=0 // pred_fallthru
    _
  // Predicated region
  $region34: #{neural_net_forward.1} parent=0 // pred_check
    _
  $region35: #{neural_net_forward.1} parent=0 // pred_check_branch
    %1548 = sbr.rel (0) target = $region37
  $region36: #{neural_net_forward.1} parent=0 // pred_region
    _
  $region37: #{neural_net_forward.1} parent=0 // pred_fallthru
    _

</llo_original>
